<compile_context>
chip_gen: v6e
topology: v6e:2x2x1
jax: 0.10.0
libtpu: 0.0.40
codegen_flags: <defaults>
</compile_context>

<pallas_src>
import functools
import math

import numpy as np
import jax
import jax.numpy as jnp
from jax.experimental import pallas as pl
from jax.experimental.pallas import tpu as pltpu


# ----------------------------- Pallas kernel --------------------------------

def _msr_kernel(x_ref, wq_ref, wk_ref, wv_ref, wg_ref, wo_ref,
                cosq_ref, sqne_ref, sqo_ref, cosk_ref, skne_ref, sko_ref,
                cmask_ref, pooldn_ref, decay_ref, gnw_ref, gnb_ref,
                o_ref, *, tb, seq, heads, eps):
    f32 = jnp.float32
    bf16 = jnp.bfloat16
    hidden = x_ref.shape[-1]
    rows = tb * seq

    # (tb, S, H) -> (tb*S, H): leading-dim merge; S == f32 sublane tile, so
    # this is a relayout-free shape cast.
    x = x_ref[...].reshape(rows, hidden)
    xb = x.astype(bf16)

    # ---- projections: tall-M bf16 MXU matmuls, f32 accumulation -------------
    q = jnp.dot(xb, wq_ref[...], preferred_element_type=f32)
    k = jnp.dot(xb, wk_ref[...], preferred_element_type=f32)
    v = jnp.dot(xb, wv_ref[...], preferred_element_type=f32)
    g = jnp.dot(xb, wg_ref[...], preferred_element_type=f32)

    # ---- XPOS rotary scaling (tables pre-tiled to (rows, H) on the host) ----
    # rotate_every_two(z) * sin == roll(z,-1)*(-sin on even lanes)
    #                            + roll(z,+1)*( sin on odd  lanes)
    # (wrap-around lanes are multiplied by zero, so a plain roll is exact;
    #  jnp.roll is used because H=32 is not a 128-lane multiple.)
    def xpos(z, cos_t, sin_neg_even, sin_odd):
        zr = (jnp.roll(z, -1, axis=1) * sin_neg_even
              + jnp.roll(z, 1, axis=1) * sin_odd)
        return z * cos_t + zr

    q = xpos(q, cosq_ref[...], sqne_ref[...], sqo_ref[...])
    k = xpos(k, cosk_ref[...], skne_ref[...], sko_ref[...])

    # Back to (tb, S, H) for the batched retention matmuls (cheap reshape).
    q3 = q.reshape(tb, seq, hidden)
    k3 = k.reshape(tb, seq, hidden)
    v3 = v.reshape(tb, seq, hidden)

    # ---- fold heads into the retention key axis via per-head column masks ---
    # Block h of kstk/vstk keeps only head h's columns, so one full-width
    # contraction reproduces every per-head Q_h K_h^T, and the value matmul
    # drops each head's result into its own columns.  Valid/cheap while
    # H <= MXU depth (true here).
    cmask = cmask_ref[...]                              # (heads, H) one-hot
    kstk = jnp.concatenate([k3 * cmask[h:h + 1] for h in range(heads)], axis=1)
    vstk = jnp.concatenate([v3 * cmask[h:h + 1] for h in range(heads)], axis=1)

    decay = decay_ref[...]                              # (S, heads*S), host-built

    # ---- retention: two batched MXU matmuls cover every (slice, head) -------
    scores = jnp.einsum('bqh,bnh->bqn', q3, kstk,
                        preferred_element_type=f32) * decay[None]   # (tb,S,heads*S)
    y3 = jnp.einsum('bqn,bnh->bqh', scores, vstk,
                    preferred_element_type=f32)                      # (tb,S,H)
    y = y3.reshape(rows, hidden)

    # ---- GroupNorm (heads groups): (H,heads)/(heads,H) pooling pair ---------
    pooldn = pooldn_ref[...]                            # (H, heads), 1/hs weights
    mean_f = jnp.dot(jnp.dot(y, pooldn, preferred_element_type=f32),
                     cmask, preferred_element_type=f32)
    yc = y - mean_f
    var_f = jnp.dot(jnp.dot(yc * yc, pooldn, preferred_element_type=f32),
                    cmask, preferred_element_type=f32)
    y = yc * jax.lax.rsqrt(var_f + eps) * gnw_ref[...] + gnb_ref[...]

    # ---- gate, then output projection: (swish(X W_G) * Y) @ W_O -------------
    g = g * jax.nn.sigmoid(g)
    out = jnp.dot((g * y).astype(bf16), wo_ref[...], preferred_element_type=f32)
    o_ref[...] = out.reshape(tb, seq, hidden).astype(o_ref.dtype)


# ------------------------------- wrapper -------------------------------------

def _vmem_capacity_bytes():
    try:
        info = pltpu.get_tpu_info()
        cap = getattr(info, "vmem_capacity_bytes", None)
        if cap:
            return int(cap)
    except Exception:
        pass
    return 64 << 20   # conservative: v7x per-TC VMEM


def _vmem_estimate(tb, seq, heads, hidden):
    """Generous per-grid-step VMEM estimate (residents + intermediates)."""
    rows = tb * seq
    blk = rows * hidden * 4                    # one (rows, H) f32 slab
    est = 0
    est += 2 * 5 * hidden * hidden * 2         # bf16 weights, double-buffered
    est += 2 * 6 * blk                         # tiled XPOS tables (x2 buffering)
    est += 2 * (2 * heads * hidden + seq * heads * seq + 2 * hidden) * 4
    est += 2 * 2 * blk                         # x block + out block (double-buffered)
    est += blk // 2                            # bf16 copy of x
    est += 8 * blk                             # q/k/v/g + xpos temporaries
    est += 2 * heads * blk                     # kstk / vstk
    est += tb * seq * heads * seq * 4          # scores
    est += 5 * blk                             # y, mean, centered, var, gated
    return est


def _pick_block(bn, seq, heads, hidden, budget):
    """Largest tb dividing bn that fits the VMEM budget and (when bn >= 2)
    leaves >=2 grid steps so both v7x TensorCores get work."""
    best = 1
    for cand in range(1, bn + 1):
        if bn % cand:
            continue
        if bn >= 2 and bn // cand < 2:
            continue
        if _vmem_estimate(cand, seq, heads, hidden) <= budget:
            best = cand
    return best


def multiscale_retention(x, params, *, heads):
    """x: (B, N, S, H) float32. Returns (B, N, S, H)."""
    (wq, wk, wv, wg, wo, cosq, sinq, cosk, sink, gammas, gnw, gnb) = params
    B, N, S, H = x.shape
    hs = H // heads
    BN = B * N

    vmem_cap = _vmem_capacity_bytes()
    budget = int(0.70 * vmem_cap)
    tb = _pick_block(BN, S, heads, H, budget)
    rows_blk = tb * S
    est = _vmem_estimate(tb, S, heads, H)
    vmem_limit = int(min(0.75 * vmem_cap, max(est + (4 << 20), 16 << 20)))

    # ---- host-side derived constants (layout / masking / decay helpers) -----
    lane = np.arange(H)
    even = jnp.asarray(lane % 2 == 0)

    def tile_blk(a):                                    # (S, H) -> (rows_blk, H)
        return jnp.tile(a.astype(jnp.float32), (tb, 1))

    cosq_t = tile_blk(cosq)
    sq_ne_t = tile_blk(jnp.where(even, -sinq, 0.0))
    sq_o_t = tile_blk(jnp.where(even, 0.0, sinq))
    cosk_t = tile_blk(cosk)
    sk_ne_t = tile_blk(jnp.where(even, -sink, 0.0))
    sk_o_t = tile_blk(jnp.where(even, 0.0, sink))

    cmask_np = (lane[None, :] // hs == np.arange(heads)[:, None]).astype(np.float32)
    pooldn_np = cmask_np.T / float(hs)                  # (H, heads)

    n = np.arange(S, dtype=np.float64)[:, None]
    m = np.arange(S, dtype=np.float64)[None, :]
    decay_np = np.concatenate(
        [np.where(n >= m, np.float64(gm) ** np.maximum(n - m, 0.0), 0.0)
         for gm in gammas], axis=1).astype(np.float32)  # (S, heads*S)

    bf16 = jnp.bfloat16
    wq_b, wk_b, wv_b, wg_b, wo_b = (w.astype(bf16) for w in (wq, wk, wv, wg, wo))

    resident = [wq_b, wk_b, wv_b, wg_b, wo_b,
                cosq_t, sq_ne_t, sq_o_t, cosk_t, sk_ne_t, sk_o_t,
                jnp.asarray(cmask_np), jnp.asarray(pooldn_np),
                jnp.asarray(decay_np), gnw, gnb]

    def _full(a):
        nd = a.ndim
        return pl.BlockSpec(a.shape, lambda i, _nd=nd: (0,) * _nd)

    kernel = functools.partial(_msr_kernel, tb=tb, seq=S, heads=heads, eps=1e-5)

    x3 = x.reshape(BN, S, H)
    out = pl.pallas_call(
        kernel,
        out_shape=jax.ShapeDtypeStruct((BN, S, H), x.dtype),
        grid=(BN // tb,),
        in_specs=[pl.BlockSpec((tb, S, H), lambda i: (i, 0, 0))]
                 + [_full(a) for a in resident],
        out_specs=pl.BlockSpec((tb, S, H), lambda i: (i, 0, 0)),
        compiler_params=pltpu.CompilerParams(
            dimension_semantics=("parallel",),
            vmem_limit_bytes=vmem_limit),
    )(x3, *resident)
    return out.reshape(B, N, S, H)


# --------------------------- parameter / constant setup ----------------------

def xpos_factors(seq_len, head_size, heads, scale_base=512):
    half = head_size // 2
    scale_vec = (np.arange(0, head_size, 2) + 0.4 * head_size) / (1.4 * head_size)
    pos = np.arange(seq_len, dtype=np.float64)
    scale = scale_vec[None, :] ** (pos[:, None] / scale_base)          # (S, half)
    inv_freq = 1.0 / (10000.0 ** (np.arange(0, half) / half))
    sinusoid = pos[:, None] * inv_freq[None, :]
    sin, cos = np.sin(sinusoid), np.cos(sinusoid)
    dup = lambda m: np.repeat(m, 2, axis=1)                            # duplicate_interleave
    tile = lambda m: np.tile(m, (1, heads)).astype(np.float32)
    return (tile(dup(cos * scale)), tile(dup(sin * scale)),            # Q factors
            tile(dup(cos / scale)), tile(dup(sin / scale)))            # K factors (downscale)


def init_params(key, hidden, heads, seq_len):
    head_size = hidden // heads
    v_dim = hidden  # double_v_dim = False
    bound = 1.0 / math.sqrt(hidden)
    ks = jax.random.split(key, 3 * heads + 2)

    def unif(k, shape):
        return jax.random.uniform(k, shape, jnp.float32, -bound, bound)

    wq = jnp.concatenate([unif(ks[3 * h + 0], (hidden, head_size)) for h in range(heads)], axis=1)
    wk = jnp.concatenate([unif(ks[3 * h + 1], (hidden, head_size)) for h in range(heads)], axis=1)
    wv = jnp.concatenate([unif(ks[3 * h + 2], (hidden, head_size)) for h in range(heads)], axis=1)
    wg = unif(ks[-2], (hidden, v_dim))
    wo = unif(ks[-1], (v_dim, hidden))

    gammas = (1.0 - np.exp(np.linspace(math.log(1 / 32), math.log(1 / 512), heads))).tolist()
    cosq, sinq, cosk, sink = (jnp.asarray(a) for a in xpos_factors(seq_len, head_size, heads))
    gnw = jnp.ones((1, v_dim), jnp.float32)   # GroupNorm affine (weight=1, bias=0)
    gnb = jnp.zeros((1, v_dim), jnp.float32)
    return (wq, wk, wv, wg, wo, cosq, sinq, cosk, sink, gammas, gnw, gnb)


# ------------------------------ plain-JAX reference ---------------------------

def reference(x, params, *, heads):
    (wq, wk, wv, wg, wo, cosq, sinq, cosk, sink, gammas, gnw, gnb) = params
    B, N, S, H = x.shape
    hs = H // heads

    q = x @ wq
    k = x @ wk
    v = x @ wv

    def rot2(z):
        z1 = z[..., 0::2]
        z2 = z[..., 1::2]
        return jnp.stack([-z2, z1], axis=-1).reshape(z.shape)

    q = q * cosq + rot2(q) * sinq
    k = k * cosk + rot2(k) * sink

    n = np.arange(S)[:, None]
    m = np.arange(S)[None, :]
    ys = []
    for h in range(heads):
        sl = slice(h * hs, (h + 1) * hs)
        d = np.where(n >= m, np.float64(gammas[h]) ** np.maximum(n - m, 0), 0.0).astype(np.float32)
        sc = jnp.einsum('bnqd,bnkd->bnqk', q[..., sl], k[..., sl]) * jnp.asarray(d)
        ys.append(jnp.einsum('bnqk,bnkd->bnqd', sc, v[..., sl]))
    y = jnp.concatenate(ys, axis=-1)

    yg = y.reshape(B, N, S, heads, hs)
    mean = yg.mean(-1, keepdims=True)
    var = ((yg - mean) ** 2).mean(-1, keepdims=True)
    y = ((yg - mean) / jnp.sqrt(var + 1e-5)).reshape(B, N, S, H)
    y = y * gnw.reshape(H) + gnb.reshape(H)

    g = x @ wg
    g = g * jax.nn.sigmoid(g)
    # Python `*` and `@` are equal precedence, left-associative:
    # swish(X@W_G) * Y @ W_O  ==  (swish(X@W_G) * Y) @ W_O
    return (g * y) @ wo


# ----------------------------------- main -------------------------------------

if __name__ == "__main__":
    B, N, S, H, HEADS = 2, 4, 8, 32, 4

    key = jax.random.PRNGKey(0)
    kx, kp = jax.random.split(key)
    x = jax.random.normal(kx, (B, N, S, H), jnp.float32)
    params = init_params(kp, H, HEADS, S)

    out = jax.block_until_ready(multiscale_retention(x, params, heads=HEADS))

    with jax.default_matmul_precision("highest"):
        ref = jax.block_until_ready(reference(x, params, heads=HEADS))

    assert out.shape == (B, N, S, H), out.shape
    # bf16 MXU operands (per perf feedback) with f32 accumulation -> tolerance
    # sized for bf16 input rounding through the projection / output matmuls.
    diff = jnp.abs(out - ref)
    ok = bool(jnp.all(diff <= 2e-2 + 2e-2 * jnp.abs(ref)))
    assert ok, f"mismatch vs reference: max abs diff {float(jnp.max(diff))}"

    print("KERNEL_OK")
</pallas_src>

<mosaic_0001>
module attributes {stable_mosaic.version = 11 : i64} {
  func.func @_msr_kernel(%arg0: i32, %arg1: memref<4x8x32xf32, #tpu.memory_space<vmem>>, %arg2: memref<32x32xbf16, #tpu.memory_space<vmem>>, %arg3: memref<32x32xbf16, #tpu.memory_space<vmem>>, %arg4: memref<32x32xbf16, #tpu.memory_space<vmem>>, %arg5: memref<32x32xbf16, #tpu.memory_space<vmem>>, %arg6: memref<32x32xbf16, #tpu.memory_space<vmem>>, %arg7: memref<32x32xf32, #tpu.memory_space<vmem>>, %arg8: memref<32x32xf32, #tpu.memory_space<vmem>>, %arg9: memref<32x32xf32, #tpu.memory_space<vmem>>, %arg10: memref<32x32xf32, #tpu.memory_space<vmem>>, %arg11: memref<32x32xf32, #tpu.memory_space<vmem>>, %arg12: memref<32x32xf32, #tpu.memory_space<vmem>>, %arg13: memref<4x32xf32, #tpu.memory_space<vmem>>, %arg14: memref<32x4xf32, #tpu.memory_space<vmem>>, %arg15: memref<8x32xf32, #tpu.memory_space<vmem>>, %arg16: memref<1x32xf32, #tpu.memory_space<vmem>>, %arg17: memref<1x32xf32, #tpu.memory_space<vmem>>, %arg18: memref<4x8x32xf32, #tpu.memory_space<vmem>>) attributes {dimension_semantics = [#tpu.dimension_semantics<parallel>], iteration_bounds = array<i64: 2>, scalar_prefetch = 0 : i64, scratch_operands = 0 : i64, tpu.core_type = #tpu.core_type<tc>, window_params = [{transform_indices = @transform_0, window_bounds = array<i64: 4, 8, 32>}, {pipeline_mode = #tpu.pipeline_mode<synchronous>, transform_indices = @transform_1, window_bounds = array<i64: 32, 32>}, {pipeline_mode = #tpu.pipeline_mode<synchronous>, transform_indices = @transform_2, window_bounds = array<i64: 32, 32>}, {pipeline_mode = #tpu.pipeline_mode<synchronous>, transform_indices = @transform_3, window_bounds = array<i64: 32, 32>}, {pipeline_mode = #tpu.pipeline_mode<synchronous>, transform_indices = @transform_4, window_bounds = array<i64: 32, 32>}, {pipeline_mode = #tpu.pipeline_mode<synchronous>, transform_indices = @transform_5, window_bounds = array<i64: 32, 32>}, {pipeline_mode = #tpu.pipeline_mode<synchronous>, transform_indices = @transform_6, window_bounds = array<i64: 32, 32>}, {pipeline_mode = #tpu.pipeline_mode<synchronous>, transform_indices = @transform_7, window_bounds = array<i64: 32, 32>}, {pipeline_mode = #tpu.pipeline_mode<synchronous>, transform_indices = @transform_8, window_bounds = array<i64: 32, 32>}, {pipeline_mode = #tpu.pipeline_mode<synchronous>, transform_indices = @transform_9, window_bounds = array<i64: 32, 32>}, {pipeline_mode = #tpu.pipeline_mode<synchronous>, transform_indices = @transform_10, window_bounds = array<i64: 32, 32>}, {pipeline_mode = #tpu.pipeline_mode<synchronous>, transform_indices = @transform_11, window_bounds = array<i64: 32, 32>}, {pipeline_mode = #tpu.pipeline_mode<synchronous>, transform_indices = @transform_12, window_bounds = array<i64: 4, 32>}, {pipeline_mode = #tpu.pipeline_mode<synchronous>, transform_indices = @transform_13, window_bounds = array<i64: 32, 4>}, {pipeline_mode = #tpu.pipeline_mode<synchronous>, transform_indices = @transform_14, window_bounds = array<i64: 8, 32>}, {pipeline_mode = #tpu.pipeline_mode<synchronous>, transform_indices = @transform_15, window_bounds = array<i64: 1, 32>}, {pipeline_mode = #tpu.pipeline_mode<synchronous>, transform_indices = @transform_16, window_bounds = array<i64: 1, 32>}, {transform_indices = @transform_17, window_bounds = array<i64: 4, 8, 32>}]} {
    %c0 = arith.constant 0 : index
    %c0_0 = arith.constant 0 : index
    %c0_1 = arith.constant 0 : index
    %0 = vector.load %arg1[%c0, %c0_0, %c0_1] : memref<4x8x32xf32, #tpu.memory_space<vmem>>, vector<4x8x32xf32>
    %1 = vector.shape_cast %0 : vector<4x8x32xf32> to vector<32x32xf32>
    %2 = arith.truncf %1 : vector<32x32xf32> to vector<32x32xbf16>
    %c0_2 = arith.constant 0 : index
    %c0_3 = arith.constant 0 : index
    %3 = vector.load %arg2[%c0_2, %c0_3] : memref<32x32xbf16, #tpu.memory_space<vmem>>, vector<32x32xbf16>
    %cst = arith.constant dense<0.000000e+00> : vector<32x32xf32>
    %4 = tpu.matmul %2, %3, %cst {dimension_numbers = #tpu.dot_dimension_numbers<[1], [0], [0], [1], [0, 0, 1, 1], [], []>} : vector<32x32xbf16>, vector<32x32xbf16>, vector<32x32xf32> -> vector<32x32xf32>
    %c0_4 = arith.constant 0 : index
    %c0_5 = arith.constant 0 : index
    %5 = vector.load %arg3[%c0_4, %c0_5] : memref<32x32xbf16, #tpu.memory_space<vmem>>, vector<32x32xbf16>
    %cst_6 = arith.constant dense<0.000000e+00> : vector<32x32xf32>
    %6 = tpu.matmul %2, %5, %cst_6 {dimension_numbers = #tpu.dot_dimension_numbers<[1], [0], [0], [1], [0, 0, 1, 1], [], []>} : vector<32x32xbf16>, vector<32x32xbf16>, vector<32x32xf32> -> vector<32x32xf32>
    %c0_7 = arith.constant 0 : index
    %c0_8 = arith.constant 0 : index
    %7 = vector.load %arg4[%c0_7, %c0_8] : memref<32x32xbf16, #tpu.memory_space<vmem>>, vector<32x32xbf16>
    %cst_9 = arith.constant dense<0.000000e+00> : vector<32x32xf32>
    %8 = tpu.matmul %2, %7, %cst_9 {dimension_numbers = #tpu.dot_dimension_numbers<[1], [0], [0], [1], [0, 0, 1, 1], [], []>} : vector<32x32xbf16>, vector<32x32xbf16>, vector<32x32xf32> -> vector<32x32xf32>
    %c0_10 = arith.constant 0 : index
    %c0_11 = arith.constant 0 : index
    %9 = vector.load %arg5[%c0_10, %c0_11] : memref<32x32xbf16, #tpu.memory_space<vmem>>, vector<32x32xbf16>
    %cst_12 = arith.constant dense<0.000000e+00> : vector<32x32xf32>
    %10 = tpu.matmul %2, %9, %cst_12 {dimension_numbers = #tpu.dot_dimension_numbers<[1], [0], [0], [1], [0, 0, 1, 1], [], []>} : vector<32x32xbf16>, vector<32x32xbf16>, vector<32x32xf32> -> vector<32x32xf32>
    %c0_13 = arith.constant 0 : index
    %c0_14 = arith.constant 0 : index
    %11 = vector.load %arg7[%c0_13, %c0_14] : memref<32x32xf32, #tpu.memory_space<vmem>>, vector<32x32xf32>
    %c0_15 = arith.constant 0 : index
    %c0_16 = arith.constant 0 : index
    %12 = vector.load %arg8[%c0_15, %c0_16] : memref<32x32xf32, #tpu.memory_space<vmem>>, vector<32x32xf32>
    %c0_17 = arith.constant 0 : index
    %c0_18 = arith.constant 0 : index
    %13 = vector.load %arg9[%c0_17, %c0_18] : memref<32x32xf32, #tpu.memory_space<vmem>>, vector<32x32xf32>
    %14 = vector.extract_strided_slice %4 {offsets = [0, 1], sizes = [32, 31], strides = [1, 1]} : vector<32x32xf32> to vector<32x31xf32>
    %15 = vector.extract_strided_slice %4 {offsets = [0, 0], sizes = [32, 1], strides = [1, 1]} : vector<32x32xf32> to vector<32x1xf32>
    %16 = tpu.concatenate %14, %15 in 1 : vector<32x31xf32>, vector<32x1xf32> -> vector<32x32xf32>
    %17 = arith.mulf %16, %12 : vector<32x32xf32>
    %18 = vector.extract_strided_slice %4 {offsets = [0, 31], sizes = [32, 1], strides = [1, 1]} : vector<32x32xf32> to vector<32x1xf32>
    %19 = vector.extract_strided_slice %4 {offsets = [0, 0], sizes = [32, 31], strides = [1, 1]} : vector<32x32xf32> to vector<32x31xf32>
    %20 = tpu.concatenate %18, %19 in 1 : vector<32x1xf32>, vector<32x31xf32> -> vector<32x32xf32>
    %21 = arith.mulf %20, %13 : vector<32x32xf32>
    %22 = arith.addf %17, %21 : vector<32x32xf32>
    %23 = arith.mulf %4, %11 : vector<32x32xf32>
    %24 = arith.addf %23, %22 : vector<32x32xf32>
    %c0_19 = arith.constant 0 : index
    %c0_20 = arith.constant 0 : index
    %25 = vector.load %arg10[%c0_19, %c0_20] : memref<32x32xf32, #tpu.memory_space<vmem>>, vector<32x32xf32>
    %c0_21 = arith.constant 0 : index
    %c0_22 = arith.constant 0 : index
    %26 = vector.load %arg11[%c0_21, %c0_22] : memref<32x32xf32, #tpu.memory_space<vmem>>, vector<32x32xf32>
    %c0_23 = arith.constant 0 : index
    %c0_24 = arith.constant 0 : index
    %27 = vector.load %arg12[%c0_23, %c0_24] : memref<32x32xf32, #tpu.memory_space<vmem>>, vector<32x32xf32>
    %28 = vector.extract_strided_slice %6 {offsets = [0, 1], sizes = [32, 31], strides = [1, 1]} : vector<32x32xf32> to vector<32x31xf32>
    %29 = vector.extract_strided_slice %6 {offsets = [0, 0], sizes = [32, 1], strides = [1, 1]} : vector<32x32xf32> to vector<32x1xf32>
    %30 = tpu.concatenate %28, %29 in 1 : vector<32x31xf32>, vector<32x1xf32> -> vector<32x32xf32>
    %31 = arith.mulf %30, %26 : vector<32x32xf32>
    %32 = vector.extract_strided_slice %6 {offsets = [0, 31], sizes = [32, 1], strides = [1, 1]} : vector<32x32xf32> to vector<32x1xf32>
    %33 = vector.extract_strided_slice %6 {offsets = [0, 0], sizes = [32, 31], strides = [1, 1]} : vector<32x32xf32> to vector<32x31xf32>
    %34 = tpu.concatenate %32, %33 in 1 : vector<32x1xf32>, vector<32x31xf32> -> vector<32x32xf32>
    %35 = arith.mulf %34, %27 : vector<32x32xf32>
    %36 = arith.addf %31, %35 : vector<32x32xf32>
    %37 = arith.mulf %6, %25 : vector<32x32xf32>
    %38 = arith.addf %37, %36 : vector<32x32xf32>
    %39 = vector.shape_cast %24 : vector<32x32xf32> to vector<4x8x32xf32>
    %40 = vector.shape_cast %38 : vector<32x32xf32> to vector<4x8x32xf32>
    %41 = vector.shape_cast %8 : vector<32x32xf32> to vector<4x8x32xf32>
    %c0_25 = arith.constant 0 : index
    %c0_26 = arith.constant 0 : index
    %42 = vector.load %arg13[%c0_25, %c0_26] : memref<4x32xf32, #tpu.memory_space<vmem>>, vector<4x32xf32>
    %43 = vector.extract_strided_slice %42 {offsets = [0, 0], sizes = [1, 32], strides = [1, 1]} : vector<4x32xf32> to vector<1x32xf32>
    %44 = vector.shape_cast %43 : vector<1x32xf32> to vector<1x1x32xf32>
    %45 = vector.broadcast %44 : vector<1x1x32xf32> to vector<4x8x32xf32>
    %46 = arith.mulf %40, %45 : vector<4x8x32xf32>
    %47 = vector.extract_strided_slice %42 {offsets = [1, 0], sizes = [1, 32], strides = [1, 1]} : vector<4x32xf32> to vector<1x32xf32>
    %48 = vector.shape_cast %47 : vector<1x32xf32> to vector<1x1x32xf32>
    %49 = vector.broadcast %48 : vector<1x1x32xf32> to vector<4x8x32xf32>
    %50 = arith.mulf %40, %49 : vector<4x8x32xf32>
    %51 = vector.extract_strided_slice %42 {offsets = [2, 0], sizes = [1, 32], strides = [1, 1]} : vector<4x32xf32> to vector<1x32xf32>
    %52 = vector.shape_cast %51 : vector<1x32xf32> to vector<1x1x32xf32>
    %53 = vector.broadcast %52 : vector<1x1x32xf32> to vector<4x8x32xf32>
    %54 = arith.mulf %40, %53 : vector<4x8x32xf32>
    %55 = vector.extract_strided_slice %42 {offsets = [3, 0], sizes = [1, 32], strides = [1, 1]} : vector<4x32xf32> to vector<1x32xf32>
    %56 = vector.shape_cast %55 : vector<1x32xf32> to vector<1x1x32xf32>
    %57 = vector.broadcast %56 : vector<1x1x32xf32> to vector<4x8x32xf32>
    %58 = arith.mulf %40, %57 : vector<4x8x32xf32>
    %59 = tpu.concatenate %46, %50, %54, %58 in 1 : vector<4x8x32xf32>, vector<4x8x32xf32>, vector<4x8x32xf32>, vector<4x8x32xf32> -> vector<4x32x32xf32>
    %60 = vector.extract_strided_slice %42 {offsets = [0, 0], sizes = [1, 32], strides = [1, 1]} : vector<4x32xf32> to vector<1x32xf32>
    %61 = vector.shape_cast %60 : vector<1x32xf32> to vector<1x1x32xf32>
    %62 = vector.broadcast %61 : vector<1x1x32xf32> to vector<4x8x32xf32>
    %63 = arith.mulf %41, %62 : vector<4x8x32xf32>
    %64 = vector.extract_strided_slice %42 {offsets = [1, 0], sizes = [1, 32], strides = [1, 1]} : vector<4x32xf32> to vector<1x32xf32>
    %65 = vector.shape_cast %64 : vector<1x32xf32> to vector<1x1x32xf32>
    %66 = vector.broadcast %65 : vector<1x1x32xf32> to vector<4x8x32xf32>
    %67 = arith.mulf %41, %66 : vector<4x8x32xf32>
    %68 = vector.extract_strided_slice %42 {offsets = [2, 0], sizes = [1, 32], strides = [1, 1]} : vector<4x32xf32> to vector<1x32xf32>
    %69 = vector.shape_cast %68 : vector<1x32xf32> to vector<1x1x32xf32>
    %70 = vector.broadcast %69 : vector<1x1x32xf32> to vector<4x8x32xf32>
    %71 = arith.mulf %41, %70 : vector<4x8x32xf32>
    %72 = vector.extract_strided_slice %42 {offsets = [3, 0], sizes = [1, 32], strides = [1, 1]} : vector<4x32xf32> to vector<1x32xf32>
    %73 = vector.shape_cast %72 : vector<1x32xf32> to vector<1x1x32xf32>
    %74 = vector.broadcast %73 : vector<1x1x32xf32> to vector<4x8x32xf32>
    %75 = arith.mulf %41, %74 : vector<4x8x32xf32>
    %76 = tpu.concatenate %63, %67, %71, %75 in 1 : vector<4x8x32xf32>, vector<4x8x32xf32>, vector<4x8x32xf32>, vector<4x8x32xf32> -> vector<4x32x32xf32>
    %c0_27 = arith.constant 0 : index
    %c0_28 = arith.constant 0 : index
    %77 = vector.load %arg15[%c0_27, %c0_28] : memref<8x32xf32, #tpu.memory_space<vmem>>, vector<8x32xf32>
    "tpu.trace_start"() <{level = 10 : i32, message = "bqh,bnh->bqn"}> : () -> ()
    %cst_29 = arith.constant dense<0.000000e+00> : vector<4x8x32xf32>
    %78 = tpu.matmul %39, %59, %cst_29 {dimension_numbers = #tpu.dot_dimension_numbers<[2], [2], [1], [1], [0, 0, 0, 1, 1, 1], [0], [0]>} : vector<4x8x32xf32>, vector<4x32x32xf32>, vector<4x8x32xf32> -> vector<4x8x32xf32>
    "tpu.trace_stop"() : () -> ()
    %79 = vector.shape_cast %77 : vector<8x32xf32> to vector<1x8x32xf32>
    %80 = vector.broadcast %79 : vector<1x8x32xf32> to vector<4x8x32xf32>
    %81 = arith.mulf %78, %80 : vector<4x8x32xf32>
    "tpu.trace_start"() <{level = 10 : i32, message = "bqn,bnh->bqh"}> : () -> ()
    %cst_30 = arith.constant dense<0.000000e+00> : vector<4x8x32xf32>
    %82 = tpu.matmul %81, %76, %cst_30 {dimension_numbers = #tpu.dot_dimension_numbers<[2], [1], [1], [2], [0, 0, 0, 1, 1, 2], [0], [0]>} : vector<4x8x32xf32>, vector<4x32x32xf32>, vector<4x8x32xf32> -> vector<4x8x32xf32>
    "tpu.trace_stop"() : () -> ()
    %83 = vector.shape_cast %82 : vector<4x8x32xf32> to vector<32x32xf32>
    %c0_31 = arith.constant 0 : index
    %c0_32 = arith.constant 0 : index
    %84 = vector.load %arg14[%c0_31, %c0_32] : memref<32x4xf32, #tpu.memory_space<vmem>>, vector<32x4xf32>
    %cst_33 = arith.constant dense<0.000000e+00> : vector<32x4xf32>
    %85 = tpu.matmul %83, %84, %cst_33 {dimension_numbers = #tpu.dot_dimension_numbers<[1], [0], [0], [1], [0, 0, 1, 1], [], []>} : vector<32x32xf32>, vector<32x4xf32>, vector<32x4xf32> -> vector<32x4xf32>
    %cst_34 = arith.constant dense<0.000000e+00> : vector<32x32xf32>
    %86 = tpu.matmul %85, %42, %cst_34 {dimension_numbers = #tpu.dot_dimension_numbers<[1], [0], [0], [1], [0, 0, 1, 1], [], []>} : vector<32x4xf32>, vector<4x32xf32>, vector<32x32xf32> -> vector<32x32xf32>
    %87 = arith.subf %83, %86 : vector<32x32xf32>
    %88 = arith.mulf %87, %87 : vector<32x32xf32>
    %cst_35 = arith.constant dense<0.000000e+00> : vector<32x4xf32>
    %89 = tpu.matmul %88, %84, %cst_35 {dimension_numbers = #tpu.dot_dimension_numbers<[1], [0], [0], [1], [0, 0, 1, 1], [], []>} : vector<32x32xf32>, vector<32x4xf32>, vector<32x4xf32> -> vector<32x4xf32>
    %cst_36 = arith.constant dense<0.000000e+00> : vector<32x32xf32>
    %90 = tpu.matmul %89, %42, %cst_36 {dimension_numbers = #tpu.dot_dimension_numbers<[1], [0], [0], [1], [0, 0, 1, 1], [], []>} : vector<32x4xf32>, vector<4x32xf32>, vector<32x32xf32> -> vector<32x32xf32>
    %cst_37 = arith.constant 9.99999974E-6 : f32
    %91 = vector.broadcast %cst_37 : f32 to vector<32x32xf32>
    %92 = arith.addf %90, %91 : vector<32x32xf32>
    %93 = math.rsqrt %92 : vector<32x32xf32>
    %94 = arith.mulf %87, %93 : vector<32x32xf32>
    %c0_38 = arith.constant 0 : index
    %c0_39 = arith.constant 0 : index
    %95 = vector.load %arg16[%c0_38, %c0_39] : memref<1x32xf32, #tpu.memory_space<vmem>>, vector<1x32xf32>
    %96 = vector.broadcast %95 : vector<1x32xf32> to vector<32x32xf32>
    %97 = arith.mulf %94, %96 : vector<32x32xf32>
    %c0_40 = arith.constant 0 : index
    %c0_41 = arith.constant 0 : index
    %98 = vector.load %arg17[%c0_40, %c0_41] : memref<1x32xf32, #tpu.memory_space<vmem>>, vector<1x32xf32>
    %99 = vector.broadcast %98 : vector<1x32xf32> to vector<32x32xf32>
    %100 = arith.addf %97, %99 : vector<32x32xf32>
    %101 = arith.negf %10 : vector<32x32xf32>
    %102 = math.exp %101 : vector<32x32xf32>
    %cst_42 = arith.constant 1.000000e+00 : f32
    %103 = vector.broadcast %cst_42 : f32 to vector<32x32xf32>
    %104 = arith.addf %103, %102 : vector<32x32xf32>
    %105 = arith.divf %103, %104 : vector<32x32xf32>
    %106 = arith.mulf %10, %105 : vector<32x32xf32>
    %107 = arith.mulf %106, %100 : vector<32x32xf32>
    %108 = arith.truncf %107 : vector<32x32xf32> to vector<32x32xbf16>
    %c0_43 = arith.constant 0 : index
    %c0_44 = arith.constant 0 : index
    %109 = vector.load %arg6[%c0_43, %c0_44] : memref<32x32xbf16, #tpu.memory_space<vmem>>, vector<32x32xbf16>
    %cst_45 = arith.constant dense<0.000000e+00> : vector<32x32xf32>
    %110 = tpu.matmul %108, %109, %cst_45 {dimension_numbers = #tpu.dot_dimension_numbers<[1], [0], [0], [1], [0, 0, 1, 1], [], []>} : vector<32x32xbf16>, vector<32x32xbf16>, vector<32x32xf32> -> vector<32x32xf32>
    %111 = vector.shape_cast %110 : vector<32x32xf32> to vector<4x8x32xf32>
    %c0_46 = arith.constant 0 : index
    %c0_47 = arith.constant 0 : index
    %c0_48 = arith.constant 0 : index
    %112 = vector.load %arg18[%c0_46, %c0_47, %c0_48] : memref<4x8x32xf32, #tpu.memory_space<vmem>>, vector<4x8x32xf32>
    tpu.vector_store %arg18[%c0_46, %c0_47, %c0_48], %111 {strides = array<i32>} : memref<4x8x32xf32, #tpu.memory_space<vmem>>, vector<4x8x32xf32>,
    return
  }
  func.func @transform_0(%arg0: i32) -> (i32, i32, i32) {
    %c0_i32 = arith.constant 0 : i32
    %c0_i32_0 = arith.constant 0 : i32
    %c0_i32_1 = arith.constant 0 : i32
    return %arg0, %c0_i32, %c0_i32_0 : i32, i32, i32
  }
  func.func @transform_1(%arg0: i32) -> (i32, i32) {
    %c0_i32 = arith.constant 0 : i32
    %c0_i32_0 = arith.constant 0 : i32
    %c0_i32_1 = arith.constant 0 : i32
    return %c0_i32, %c0_i32_0 : i32, i32
  }
  func.func @transform_2(%arg0: i32) -> (i32, i32) {
    %c0_i32 = arith.constant 0 : i32
    %c0_i32_0 = arith.constant 0 : i32
    %c0_i32_1 = arith.constant 0 : i32
    return %c0_i32, %c0_i32_0 : i32, i32
  }
  func.func @transform_3(%arg0: i32) -> (i32, i32) {
    %c0_i32 = arith.constant 0 : i32
    %c0_i32_0 = arith.constant 0 : i32
    %c0_i32_1 = arith.constant 0 : i32
    return %c0_i32, %c0_i32_0 : i32, i32
  }
  func.func @transform_4(%arg0: i32) -> (i32, i32) {
    %c0_i32 = arith.constant 0 : i32
    %c0_i32_0 = arith.constant 0 : i32
    %c0_i32_1 = arith.constant 0 : i32
    return %c0_i32, %c0_i32_0 : i32, i32
  }
  func.func @transform_5(%arg0: i32) -> (i32, i32) {
    %c0_i32 = arith.constant 0 : i32
    %c0_i32_0 = arith.constant 0 : i32
    %c0_i32_1 = arith.constant 0 : i32
    return %c0_i32, %c0_i32_0 : i32, i32
  }
  func.func @transform_6(%arg0: i32) -> (i32, i32) {
    %c0_i32 = arith.constant 0 : i32
    %c0_i32_0 = arith.constant 0 : i32
    %c0_i32_1 = arith.constant 0 : i32
    return %c0_i32, %c0_i32_0 : i32, i32
  }
  func.func @transform_7(%arg0: i32) -> (i32, i32) {
    %c0_i32 = arith.constant 0 : i32
    %c0_i32_0 = arith.constant 0 : i32
    %c0_i32_1 = arith.constant 0 : i32
    return %c0_i32, %c0_i32_0 : i32, i32
  }
  func.func @transform_8(%arg0: i32) -> (i32, i32) {
    %c0_i32 = arith.constant 0 : i32
    %c0_i32_0 = arith.constant 0 : i32
    %c0_i32_1 = arith.constant 0 : i32
    return %c0_i32, %c0_i32_0 : i32, i32
  }
  func.func @transform_9(%arg0: i32) -> (i32, i32) {
    %c0_i32 = arith.constant 0 : i32
    %c0_i32_0 = arith.constant 0 : i32
    %c0_i32_1 = arith.constant 0 : i32
    return %c0_i32, %c0_i32_0 : i32, i32
  }
  func.func @transform_10(%arg0: i32) -> (i32, i32) {
    %c0_i32 = arith.constant 0 : i32
    %c0_i32_0 = arith.constant 0 : i32
    %c0_i32_1 = arith.constant 0 : i32
    return %c0_i32, %c0_i32_0 : i32, i32
  }
  func.func @transform_11(%arg0: i32) -> (i32, i32) {
    %c0_i32 = arith.constant 0 : i32
    %c0_i32_0 = arith.constant 0 : i32
    %c0_i32_1 = arith.constant 0 : i32
    return %c0_i32, %c0_i32_0 : i32, i32
  }
  func.func @transform_12(%arg0: i32) -> (i32, i32) {
    %c0_i32 = arith.constant 0 : i32
    %c0_i32_0 = arith.constant 0 : i32
    %c0_i32_1 = arith.constant 0 : i32
    return %c0_i32, %c0_i32_0 : i32, i32
  }
  func.func @transform_13(%arg0: i32) -> (i32, i32) {
    %c0_i32 = arith.constant 0 : i32
    %c0_i32_0 = arith.constant 0 : i32
    %c0_i32_1 = arith.constant 0 : i32
    return %c0_i32, %c0_i32_0 : i32, i32
  }
  func.func @transform_14(%arg0: i32) -> (i32, i32) {
    %c0_i32 = arith.constant 0 : i32
    %c0_i32_0 = arith.constant 0 : i32
    %c0_i32_1 = arith.constant 0 : i32
    return %c0_i32, %c0_i32_0 : i32, i32
  }
  func.func @transform_15(%arg0: i32) -> (i32, i32) {
    %c0_i32 = arith.constant 0 : i32
    %c0_i32_0 = arith.constant 0 : i32
    %c0_i32_1 = arith.constant 0 : i32
    return %c0_i32, %c0_i32_0 : i32, i32
  }
  func.func @transform_16(%arg0: i32) -> (i32, i32) {
    %c0_i32 = arith.constant 0 : i32
    %c0_i32_0 = arith.constant 0 : i32
    %c0_i32_1 = arith.constant 0 : i32
    return %c0_i32, %c0_i32_0 : i32, i32
  }
  func.func @transform_17(%arg0: i32) -> (i32, i32, i32) {
    %c0_i32 = arith.constant 0 : i32
    %c0_i32_0 = arith.constant 0 : i32
    %c0_i32_1 = arith.constant 0 : i32
    return %arg0, %c0_i32, %c0_i32_0 : i32, i32, i32
  }
}

</mosaic_0001>

<llo_original>
// kernel: tpu_custom_call.1
$region0: #{tpu_custom_call.1}
  #allocation0 [shape = 'u32[]', space=smem, size = 0x4, offset = 0x4, fixed_abs, tag = 'smem constant byte address 0x4 - core index']
  #allocation1 [shape = 'u32[144,128]{1,0:T(1,128)}', space=vmem, size = 0x12000, scoped, tag = 'internal scratch']
  %s0 = inlined_call_operand.hbm [shape: f32[8,8,32], index: 0, kind: input, shape index: {}]
  %s1 = inlined_call_operand.hbm [shape: bf16[32,32], index: 1, kind: input, shape index: {}]
  %s2 = inlined_call_operand.hbm [shape: bf16[32,32], index: 2, kind: input, shape index: {}]
  %s3 = inlined_call_operand.hbm [shape: bf16[32,32], index: 3, kind: input, shape index: {}]
  %s4 = inlined_call_operand.hbm [shape: bf16[32,32], index: 4, kind: input, shape index: {}]
  %s5 = inlined_call_operand.hbm [shape: bf16[32,32], index: 5, kind: input, shape index: {}]
  %s6 = inlined_call_operand.vmem [shape: f32[32,32], index: 6, kind: input, shape index: {}]
  %s7 = inlined_call_operand.hbm [shape: f32[32,32], index: 7, kind: input, shape index: {}]
  %s8 = inlined_call_operand.hbm [shape: f32[32,32], index: 8, kind: input, shape index: {}]
  %s9 = inlined_call_operand.hbm [shape: f32[32,32], index: 9, kind: input, shape index: {}]
  %s10 = inlined_call_operand.hbm [shape: f32[32,32], index: 10, kind: input, shape index: {}]
  %s11 = inlined_call_operand.hbm [shape: f32[32,32], index: 11, kind: input, shape index: {}]
  %s12 = inlined_call_operand.vmem [shape: f32[4,32], index: 12, kind: input, shape index: {}]
  %s13 = inlined_call_operand.vmem [shape: f32[32,4], index: 13, kind: input, shape index: {}]
  %s14 = inlined_call_operand.vmem [shape: f32[8,32], index: 14, kind: input, shape index: {}]
  %s15 = inlined_call_operand.vmem [shape: f32[1,32], index: 15, kind: input, shape index: {}]
  %s16 = inlined_call_operand.vmem [shape: f32[1,32], index: 16, kind: input, shape index: {}]
  %s17 = inlined_call_operand.hbm [shape: f32[8,8,32], index: 17, kind: output, shape index: {}]
  %s18 = sld [smem:[#allocation0]]
  $region145: #{tpu_custom_call.1} parent=0
    _
  %s20 = ssub.s32 1, %s18
  %s21 = scalar_select 0, %s20, %s18
  $region1: #{tpu_custom_call.1} parent=0
    #allocation2 [shape = 'u8[32768]{0}', space=vmem, size = 0x8000, scoped, tag = 'input window, operand 0']
    #allocation3 [shape = 's32[2]{0}', space=sflag, size = 0x8, scoped, tag = 'scoped memory for tpu_custom_call.1']
    #allocation4 [shape = 's32[2]{0}', space=sflag, size = 0x8, scoped, tag = 'scoped memory for tpu_custom_call.1']
    #allocation5 [shape = 'u8[8192]{0}', space=vmem, size = 0x2000, scoped, tag = 'input window, operand 1, single buffered']
    #allocation6 [shape = 's32[1]{0}', space=sflag, size = 0x4, scoped, tag = 'scoped memory for tpu_custom_call.1']
    #allocation7 [shape = 'u8[8192]{0}', space=vmem, size = 0x2000, scoped, tag = 'input window, operand 2, single buffered']
    #allocation8 [shape = 'u8[8192]{0}', space=vmem, size = 0x2000, scoped, tag = 'input window, operand 3, single buffered']
    #allocation9 [shape = 's32[1]{0}', space=sflag, size = 0x4, scoped, tag = 'scoped memory for tpu_custom_call.1']
    #allocation10 [shape = 'u8[8192]{0}', space=vmem, size = 0x2000, scoped, tag = 'input window, operand 4, single buffered']
    #allocation11 [shape = 'u8[8192]{0}', space=vmem, size = 0x2000, scoped, tag = 'input window, operand 5, single buffered']
    #allocation12 [shape = 's32[1]{0}', space=sflag, size = 0x4, scoped, tag = 'scoped memory for tpu_custom_call.1']
    #allocation13 [shape = 'u8[16384]{0}', space=vmem, size = 0x4000, scoped, tag = 'input window, operand 7, single buffered']
    #allocation14 [shape = 'u8[16384]{0}', space=vmem, size = 0x4000, scoped, tag = 'input window, operand 8, single buffered']
    #allocation15 [shape = 's32[1]{0}', space=sflag, size = 0x4, scoped, tag = 'scoped memory for tpu_custom_call.1']
    #allocation16 [shape = 'u8[16384]{0}', space=vmem, size = 0x4000, scoped, tag = 'input window, operand 9, single buffered']
    #allocation17 [shape = 'u8[16384]{0}', space=vmem, size = 0x4000, scoped, tag = 'input window, operand 10, single buffered']
    #allocation18 [shape = 's32[1]{0}', space=sflag, size = 0x4, scoped, tag = 'scoped memory for tpu_custom_call.1']
    #allocation19 [shape = 'u8[16384]{0}', space=vmem, size = 0x4000, scoped, tag = 'input window, operand 11, single buffered']
    #allocation20 [shape = 'u8[32768]{0}', space=vmem, size = 0x8000, scoped, tag = 'output window, operand 0']
    %22 = vsyncpa [#allocation3], 0
    %s23 = scalar_lea.sflag [#allocation3], 1
    %24 = vsyncpa %s23, 0
    %25 = vsyncpa [#allocation6], 0
    %26 = vsyncpa [#allocation9], 0
    %27 = vsyncpa [#allocation12], 0
    %28 = vsyncpa [#allocation15], 0
    %29 = vsyncpa [#allocation18], 0
    %30 = vsyncpa [#allocation4], 0
    %s31 = scalar_lea.sflag [#allocation4], 1
    %32 = vsyncpa %s31, 0
    loop: start=0, step=1, limit=4
    $region2: #{tpu_custom_call.1} parent=1 // loop_pre_header
      _
    $region3: #{tpu_custom_call.1} parent=1 // loop_header
      %s34 = sphi 0, %s38
      %p35 = scmp.ge.s32.totalorder %s34, 4
      %s44 = sphi 0, %s46
      %s47 = sphi 0, %s44
      %s48 = sphi 0, %s47
      %s64 = sphi 0, %s48
      %s68 = sphi 0, %s68
      %s70 = sphi 0, %s68
      %s71 = sphi 0, %s70
      %s85 = sphi 0, %s71
      %s89 = sphi 0, %s89
      %s91 = sphi 0, %s89
      %s92 = sphi 0, %s91
      %s106 = sphi 0, %s92
      %s110 = sphi 0, %s110
      %s112 = sphi 0, %s110
      %s113 = sphi 0, %s112
      %s127 = sphi 0, %s113
      %s131 = sphi 0, %s131
      %s133 = sphi 0, %s131
      %s134 = sphi 0, %s133
      %s148 = sphi 0, %s134
      %s152 = sphi 0, %s152
      %s154 = sphi 0, %s152
      %s155 = sphi 0, %s154
      %s169 = sphi 0, %s155
      %s173 = sphi 0, %s173
      %s175 = sphi 0, %s173
      %s176 = sphi 0, %s175
      %s190 = sphi 0, %s176
      %s194 = sphi 0, %s194
      %s196 = sphi 0, %s194
      %s197 = sphi 0, %s196
      %s211 = sphi 0, %s197
      %s215 = sphi 0, %s215
      %s217 = sphi 0, %s215
      %s218 = sphi 0, %s217
      %s232 = sphi 0, %s218
      %s236 = sphi 0, %s236
      %s238 = sphi 0, %s236
      %s239 = sphi 0, %s238
      %s253 = sphi 0, %s239
      %s257 = sphi 0, %s257
      %s259 = sphi 0, %s257
      %s260 = sphi 0, %s259
      %s274 = sphi 0, %s260
      %s278 = sphi 0, %s278
      %s280 = sphi 0, %s278
      %s281 = sphi 0, %s280
      %s295 = sphi 0, %s281
      %s299 = sphi 0, %s299
      %s301 = sphi 0, %s299
      %s302 = sphi 0, %s301
      %s316 = sphi 0, %s302
      %s320 = sphi 0, %s320
      %s322 = sphi 0, %s320
      %s323 = sphi 0, %s322
      %s337 = sphi 0, %s323
      %s341 = sphi 0, %s341
      %s343 = sphi 0, %s341
      %s344 = sphi 0, %s343
      %s358 = sphi 0, %s344
      %s362 = sphi 0, %s362
      %s364 = sphi 0, %s362
      %s365 = sphi 0, %s364
      %s379 = sphi 0, %s365
      %s383 = sphi 0, %s383
      %s385 = sphi 0, %s383
      %s386 = sphi 0, %s385
      %s400 = sphi 0, %s386
      %s406 = sphi 0, %s408
      %s409 = sphi 0, %s406
      %s410 = sphi 0, %s409
      %s426 = sphi 0, %s410
    $region4: #{tpu_custom_call.1} parent=1 // loop_header_branch
      %37 = sbr.rel (%p35) target = $region8
    $region5: #{tpu_custom_call.1} parent=1 // loop_body
      %s39 = ssub.s32 %s34, 1
      %s40 = ssub.s32 %s34, 2
      %s41 = sadd.s32 %s34, 1
      %s42 = ssub.s32 %s34, %s41
      %p43 = scmp.eq.s32.totalorder %s42, 0
      %s45 = sadd.s32 %s44, 1
      %s46 = scalar_select %p43, %s44, %s45
      %p49 = pneg %p43
      %p50 = scmp.eq.s32.totalorder %s34, 1
      %p51 = por %p49, %p50
      %p52 = scmp.ne.s32.totalorder %s44, %s47
      %p53 = scmp.eq.s32.totalorder %s34, 0
      %p54 = por %p52, %p53
      %p55 = scmp.ne.s32.totalorder %s44, %s47
      %p56 = scmp.eq.s32.totalorder %s39, 1
      %p57 = por %p55, %p56
      %p58 = scmp.ne.s32.totalorder %s47, %s48
      %p59 = scmp.eq.s32.totalorder %s39, 0
      %p60 = por %p58, %p59
      %p61 = scmp.ne.s32.totalorder %s47, %s48
      %p62 = scmp.eq.s32.totalorder %s40, 1
      %p63 = por %p61, %p62
      %p65 = scmp.ne.s32.totalorder %s48, %s64
      %p66 = scmp.eq.s32.totalorder %s40, 0
      %p67 = por %p65, %p66
      %s69 = sadd.s32 %s68, 1
      %p72 = scmp.eq.s32.totalorder %s34, 1
      %p73 = scmp.ne.s32.totalorder %s68, %s70
      %p74 = scmp.eq.s32.totalorder %s34, 0
      %p75 = por %p73, %p74
      %p76 = scmp.ne.s32.totalorder %s68, %s70
      %p77 = scmp.eq.s32.totalorder %s39, 1
      %p78 = por %p76, %p77
      %p79 = scmp.ne.s32.totalorder %s70, %s71
      %p80 = scmp.eq.s32.totalorder %s39, 0
      %p81 = por %p79, %p80
      %p82 = scmp.ne.s32.totalorder %s70, %s71
      %p83 = scmp.eq.s32.totalorder %s40, 1
      %p84 = por %p82, %p83
      %p86 = scmp.ne.s32.totalorder %s71, %s85
      %p87 = scmp.eq.s32.totalorder %s40, 0
      %p88 = por %p86, %p87
      %s90 = sadd.s32 %s89, 1
      %p93 = scmp.eq.s32.totalorder %s34, 1
      %p94 = scmp.ne.s32.totalorder %s89, %s91
      %p95 = scmp.eq.s32.totalorder %s34, 0
      %p96 = por %p94, %p95
      %p97 = scmp.ne.s32.totalorder %s89, %s91
      %p98 = scmp.eq.s32.totalorder %s39, 1
      %p99 = por %p97, %p98
      %p100 = scmp.ne.s32.totalorder %s91, %s92
      %p101 = scmp.eq.s32.totalorder %s39, 0
      %p102 = por %p100, %p101
      %p103 = scmp.ne.s32.totalorder %s91, %s92
      %p104 = scmp.eq.s32.totalorder %s40, 1
      %p105 = por %p103, %p104
      %p107 = scmp.ne.s32.totalorder %s92, %s106
      %p108 = scmp.eq.s32.totalorder %s40, 0
      %p109 = por %p107, %p108
      %s111 = sadd.s32 %s110, 1
      %p114 = scmp.eq.s32.totalorder %s34, 1
      %p115 = scmp.ne.s32.totalorder %s110, %s112
      %p116 = scmp.eq.s32.totalorder %s34, 0
      %p117 = por %p115, %p116
      %p118 = scmp.ne.s32.totalorder %s110, %s112
      %p119 = scmp.eq.s32.totalorder %s39, 1
      %p120 = por %p118, %p119
      %p121 = scmp.ne.s32.totalorder %s112, %s113
      %p122 = scmp.eq.s32.totalorder %s39, 0
      %p123 = por %p121, %p122
      %p124 = scmp.ne.s32.totalorder %s112, %s113
      %p125 = scmp.eq.s32.totalorder %s40, 1
      %p126 = por %p124, %p125
      %p128 = scmp.ne.s32.totalorder %s113, %s127
      %p129 = scmp.eq.s32.totalorder %s40, 0
      %p130 = por %p128, %p129
      %s132 = sadd.s32 %s131, 1
      %p135 = scmp.eq.s32.totalorder %s34, 1
      %p136 = scmp.ne.s32.totalorder %s131, %s133
      %p137 = scmp.eq.s32.totalorder %s34, 0
      %p138 = por %p136, %p137
      %p139 = scmp.ne.s32.totalorder %s131, %s133
      %p140 = scmp.eq.s32.totalorder %s39, 1
      %p141 = por %p139, %p140
      %p142 = scmp.ne.s32.totalorder %s133, %s134
      %p143 = scmp.eq.s32.totalorder %s39, 0
      %p144 = por %p142, %p143
      %p145 = scmp.ne.s32.totalorder %s133, %s134
      %p146 = scmp.eq.s32.totalorder %s40, 1
      %p147 = por %p145, %p146
      %p149 = scmp.ne.s32.totalorder %s134, %s148
      %p150 = scmp.eq.s32.totalorder %s40, 0
      %p151 = por %p149, %p150
      %s153 = sadd.s32 %s152, 1
      %p156 = scmp.eq.s32.totalorder %s34, 1
      %p157 = scmp.ne.s32.totalorder %s152, %s154
      %p158 = scmp.eq.s32.totalorder %s34, 0
      %p159 = por %p157, %p158
      %p160 = scmp.ne.s32.totalorder %s152, %s154
      %p161 = scmp.eq.s32.totalorder %s39, 1
      %p162 = por %p160, %p161
      %p163 = scmp.ne.s32.totalorder %s154, %s155
      %p164 = scmp.eq.s32.totalorder %s39, 0
      %p165 = por %p163, %p164
      %p166 = scmp.ne.s32.totalorder %s154, %s155
      %p167 = scmp.eq.s32.totalorder %s40, 1
      %p168 = por %p166, %p167
      %p170 = scmp.ne.s32.totalorder %s155, %s169
      %p171 = scmp.eq.s32.totalorder %s40, 0
      %p172 = por %p170, %p171
      %s174 = sadd.s32 %s173, 1
      %p177 = scmp.eq.s32.totalorder %s34, 1
      %p178 = scmp.ne.s32.totalorder %s173, %s175
      %p179 = scmp.eq.s32.totalorder %s34, 0
      %p180 = por %p178, %p179
      %p181 = scmp.ne.s32.totalorder %s173, %s175
      %p182 = scmp.eq.s32.totalorder %s39, 1
      %p183 = por %p181, %p182
      %p184 = scmp.ne.s32.totalorder %s175, %s176
      %p185 = scmp.eq.s32.totalorder %s39, 0
      %p186 = por %p184, %p185
      %p187 = scmp.ne.s32.totalorder %s175, %s176
      %p188 = scmp.eq.s32.totalorder %s40, 1
      %p189 = por %p187, %p188
      %p191 = scmp.ne.s32.totalorder %s176, %s190
      %p192 = scmp.eq.s32.totalorder %s40, 0
      %p193 = por %p191, %p192
      %s195 = sadd.s32 %s194, 1
      %p198 = scmp.eq.s32.totalorder %s34, 1
      %p199 = scmp.ne.s32.totalorder %s194, %s196
      %p200 = scmp.eq.s32.totalorder %s34, 0
      %p201 = por %p199, %p200
      %p202 = scmp.ne.s32.totalorder %s194, %s196
      %p203 = scmp.eq.s32.totalorder %s39, 1
      %p204 = por %p202, %p203
      %p205 = scmp.ne.s32.totalorder %s196, %s197
      %p206 = scmp.eq.s32.totalorder %s39, 0
      %p207 = por %p205, %p206
      %p208 = scmp.ne.s32.totalorder %s196, %s197
      %p209 = scmp.eq.s32.totalorder %s40, 1
      %p210 = por %p208, %p209
      %p212 = scmp.ne.s32.totalorder %s197, %s211
      %p213 = scmp.eq.s32.totalorder %s40, 0
      %p214 = por %p212, %p213
      %s216 = sadd.s32 %s215, 1
      %p219 = scmp.eq.s32.totalorder %s34, 1
      %p220 = scmp.ne.s32.totalorder %s215, %s217
      %p221 = scmp.eq.s32.totalorder %s34, 0
      %p222 = por %p220, %p221
      %p223 = scmp.ne.s32.totalorder %s215, %s217
      %p224 = scmp.eq.s32.totalorder %s39, 1
      %p225 = por %p223, %p224
      %p226 = scmp.ne.s32.totalorder %s217, %s218
      %p227 = scmp.eq.s32.totalorder %s39, 0
      %p228 = por %p226, %p227
      %p229 = scmp.ne.s32.totalorder %s217, %s218
      %p230 = scmp.eq.s32.totalorder %s40, 1
      %p231 = por %p229, %p230
      %p233 = scmp.ne.s32.totalorder %s218, %s232
      %p234 = scmp.eq.s32.totalorder %s40, 0
      %p235 = por %p233, %p234
      %s237 = sadd.s32 %s236, 1
      %p240 = scmp.eq.s32.totalorder %s34, 1
      %p241 = scmp.ne.s32.totalorder %s236, %s238
      %p242 = scmp.eq.s32.totalorder %s34, 0
      %p243 = por %p241, %p242
      %p244 = scmp.ne.s32.totalorder %s236, %s238
      %p245 = scmp.eq.s32.totalorder %s39, 1
      %p246 = por %p244, %p245
      %p247 = scmp.ne.s32.totalorder %s238, %s239
      %p248 = scmp.eq.s32.totalorder %s39, 0
      %p249 = por %p247, %p248
      %p250 = scmp.ne.s32.totalorder %s238, %s239
      %p251 = scmp.eq.s32.totalorder %s40, 1
      %p252 = por %p250, %p251
      %p254 = scmp.ne.s32.totalorder %s239, %s253
      %p255 = scmp.eq.s32.totalorder %s40, 0
      %p256 = por %p254, %p255
      %s258 = sadd.s32 %s257, 1
      %p261 = scmp.eq.s32.totalorder %s34, 1
      %p262 = scmp.ne.s32.totalorder %s257, %s259
      %p263 = scmp.eq.s32.totalorder %s34, 0
      %p264 = por %p262, %p263
      %p265 = scmp.ne.s32.totalorder %s257, %s259
      %p266 = scmp.eq.s32.totalorder %s39, 1
      %p267 = por %p265, %p266
      %p268 = scmp.ne.s32.totalorder %s259, %s260
      %p269 = scmp.eq.s32.totalorder %s39, 0
      %p270 = por %p268, %p269
      %p271 = scmp.ne.s32.totalorder %s259, %s260
      %p272 = scmp.eq.s32.totalorder %s40, 1
      %p273 = por %p271, %p272
      %p275 = scmp.ne.s32.totalorder %s260, %s274
      %p276 = scmp.eq.s32.totalorder %s40, 0
      %p277 = por %p275, %p276
      %s279 = sadd.s32 %s278, 1
      %p282 = scmp.eq.s32.totalorder %s34, 1
      %p283 = scmp.ne.s32.totalorder %s278, %s280
      %p284 = scmp.eq.s32.totalorder %s34, 0
      %p285 = por %p283, %p284
      %p286 = scmp.ne.s32.totalorder %s278, %s280
      %p287 = scmp.eq.s32.totalorder %s39, 1
      %p288 = por %p286, %p287
      %p289 = scmp.ne.s32.totalorder %s280, %s281
      %p290 = scmp.eq.s32.totalorder %s39, 0
      %p291 = por %p289, %p290
      %p292 = scmp.ne.s32.totalorder %s280, %s281
      %p293 = scmp.eq.s32.totalorder %s40, 1
      %p294 = por %p292, %p293
      %p296 = scmp.ne.s32.totalorder %s281, %s295
      %p297 = scmp.eq.s32.totalorder %s40, 0
      %p298 = por %p296, %p297
      %s300 = sadd.s32 %s299, 1
      %p303 = scmp.eq.s32.totalorder %s34, 1
      %p304 = scmp.ne.s32.totalorder %s299, %s301
      %p305 = scmp.eq.s32.totalorder %s34, 0
      %p306 = por %p304, %p305
      %p307 = scmp.ne.s32.totalorder %s299, %s301
      %p308 = scmp.eq.s32.totalorder %s39, 1
      %p309 = por %p307, %p308
      %p310 = scmp.ne.s32.totalorder %s301, %s302
      %p311 = scmp.eq.s32.totalorder %s39, 0
      %p312 = por %p310, %p311
      %p313 = scmp.ne.s32.totalorder %s301, %s302
      %p314 = scmp.eq.s32.totalorder %s40, 1
      %p315 = por %p313, %p314
      %p317 = scmp.ne.s32.totalorder %s302, %s316
      %p318 = scmp.eq.s32.totalorder %s40, 0
      %p319 = por %p317, %p318
      %s321 = sadd.s32 %s320, 1
      %p324 = scmp.eq.s32.totalorder %s34, 1
      %p325 = scmp.ne.s32.totalorder %s320, %s322
      %p326 = scmp.eq.s32.totalorder %s34, 0
      %p327 = por %p325, %p326
      %p328 = scmp.ne.s32.totalorder %s320, %s322
      %p329 = scmp.eq.s32.totalorder %s39, 1
      %p330 = por %p328, %p329
      %p331 = scmp.ne.s32.totalorder %s322, %s323
      %p332 = scmp.eq.s32.totalorder %s39, 0
      %p333 = por %p331, %p332
      %p334 = scmp.ne.s32.totalorder %s322, %s323
      %p335 = scmp.eq.s32.totalorder %s40, 1
      %p336 = por %p334, %p335
      %p338 = scmp.ne.s32.totalorder %s323, %s337
      %p339 = scmp.eq.s32.totalorder %s40, 0
      %p340 = por %p338, %p339
      %s342 = sadd.s32 %s341, 1
      %p345 = scmp.eq.s32.totalorder %s34, 1
      %p346 = scmp.ne.s32.totalorder %s341, %s343
      %p347 = scmp.eq.s32.totalorder %s34, 0
      %p348 = por %p346, %p347
      %p349 = scmp.ne.s32.totalorder %s341, %s343
      %p350 = scmp.eq.s32.totalorder %s39, 1
      %p351 = por %p349, %p350
      %p352 = scmp.ne.s32.totalorder %s343, %s344
      %p353 = scmp.eq.s32.totalorder %s39, 0
      %p354 = por %p352, %p353
      %p355 = scmp.ne.s32.totalorder %s343, %s344
      %p356 = scmp.eq.s32.totalorder %s40, 1
      %p357 = por %p355, %p356
      %p359 = scmp.ne.s32.totalorder %s344, %s358
      %p360 = scmp.eq.s32.totalorder %s40, 0
      %p361 = por %p359, %p360
      %s363 = sadd.s32 %s362, 1
      %p366 = scmp.eq.s32.totalorder %s34, 1
      %p367 = scmp.ne.s32.totalorder %s362, %s364
      %p368 = scmp.eq.s32.totalorder %s34, 0
      %p369 = por %p367, %p368
      %p370 = scmp.ne.s32.totalorder %s362, %s364
      %p371 = scmp.eq.s32.totalorder %s39, 1
      %p372 = por %p370, %p371
      %p373 = scmp.ne.s32.totalorder %s364, %s365
      %p374 = scmp.eq.s32.totalorder %s39, 0
      %p375 = por %p373, %p374
      %p376 = scmp.ne.s32.totalorder %s364, %s365
      %p377 = scmp.eq.s32.totalorder %s40, 1
      %p378 = por %p376, %p377
      %p380 = scmp.ne.s32.totalorder %s365, %s379
      %p381 = scmp.eq.s32.totalorder %s40, 0
      %p382 = por %p380, %p381
      %s384 = sadd.s32 %s383, 1
      %p387 = scmp.eq.s32.totalorder %s34, 1
      %p388 = scmp.ne.s32.totalorder %s383, %s385
      %p389 = scmp.eq.s32.totalorder %s34, 0
      %p390 = por %p388, %p389
      %p391 = scmp.ne.s32.totalorder %s383, %s385
      %p392 = scmp.eq.s32.totalorder %s39, 1
      %p393 = por %p391, %p392
      %p394 = scmp.ne.s32.totalorder %s385, %s386
      %p395 = scmp.eq.s32.totalorder %s39, 0
      %p396 = por %p394, %p395
      %p397 = scmp.ne.s32.totalorder %s385, %s386
      %p398 = scmp.eq.s32.totalorder %s40, 1
      %p399 = por %p397, %p398
      %p401 = scmp.ne.s32.totalorder %s386, %s400
      %p402 = scmp.eq.s32.totalorder %s40, 0
      %p403 = por %p401, %p402
      %s404 = ssub.s32 %s34, %s41
      %p405 = scmp.eq.s32.totalorder %s404, 0
      %s407 = sadd.s32 %s406, 1
      %s408 = scalar_select %p405, %s406, %s407
      %p411 = pneg %p405
      %p412 = scmp.eq.s32.totalorder %s34, 1
      %p413 = por %p411, %p412
      %p414 = scmp.ne.s32.totalorder %s406, %s409
      %p415 = scmp.eq.s32.totalorder %s34, 0
      %p416 = por %p414, %p415
      %p417 = scmp.ne.s32.totalorder %s406, %s409
      %p418 = scmp.eq.s32.totalorder %s39, 1
      %p419 = por %p417, %p418
      %p420 = scmp.ne.s32.totalorder %s409, %s410
      %p421 = scmp.eq.s32.totalorder %s39, 0
      %p422 = por %p420, %p421
      %p423 = scmp.ne.s32.totalorder %s409, %s410
      %p424 = scmp.eq.s32.totalorder %s40, 1
      %p425 = por %p423, %p424
      %p427 = scmp.ne.s32.totalorder %s410, %s426
      %p428 = scmp.eq.s32.totalorder %s40, 0
      %p429 = por %p427, %p428
      %p430 = scmp.le.s32.totalorder 1, %s34
      %p431 = scmp.lt.s32.totalorder %s34, 3
      %p432 = pnand %p430, %p431
      %p433 = pneg %p432
      // Predicated region
      $region9: #{tpu_custom_call.1} parent=5 // pred_check
        _
      $region10: #{tpu_custom_call.1} parent=5 // pred_check_branch
        %435 = sbr.rel (%p432) target = $region12
      $region11: #{tpu_custom_call.1} parent=5 // pred_region
        %s436 = ssub.s32 %s34, 1
        // Predicated region
        $region13: #{tpu_custom_call.1} parent=11 // pred_check
          %p437 = pneg %p81
        $region14: #{tpu_custom_call.1} parent=11 // pred_check_branch
          %439 = sbr.rel (%p437) target = $region16
        $region15: #{tpu_custom_call.1} parent=11 // pred_region
          %s441 = ssub.s32 256, 256
          %442 = vsyncadd [#allocation6], %s441
          %s443 = sshll.u32 [#allocation5], 4
          %s444 = int_to_ptr.vmem [resolvable:$true] %s443
          %449 = dma.hbm_to_vmem [thread:$0]  %s1, 256, %s444, [#allocation6], 64, 64, 4
        $region16: #{tpu_custom_call.1} parent=11 // pred_fallthru
          _
        // Predicated region
        $region17: #{tpu_custom_call.1} parent=11 // pred_check
          %p450 = pneg %p102
        $region18: #{tpu_custom_call.1} parent=11 // pred_check_branch
          %452 = sbr.rel (%p450) target = $region20
        $region19: #{tpu_custom_call.1} parent=11 // pred_region
          %s454 = ssub.s32 256, 256
          %455 = vsyncadd [#allocation6], %s454
          %s456 = sshll.u32 [#allocation7], 4
          %s457 = int_to_ptr.vmem [resolvable:$true] %s456
          %462 = dma.hbm_to_vmem [thread:$0]  %s2, 256, %s457, [#allocation6], 64, 64, 4
        $region20: #{tpu_custom_call.1} parent=11 // pred_fallthru
          _
        // Predicated region
        $region21: #{tpu_custom_call.1} parent=11 // pred_check
          %p463 = pneg %p123
        $region22: #{tpu_custom_call.1} parent=11 // pred_check_branch
          %465 = sbr.rel (%p463) target = $region24
        $region23: #{tpu_custom_call.1} parent=11 // pred_region
          %s467 = ssub.s32 256, 256
          %468 = vsyncadd [#allocation9], %s467
          %s469 = sshll.u32 [#allocation8], 4
          %s470 = int_to_ptr.vmem [resolvable:$true] %s469
          %475 = dma.hbm_to_vmem [thread:$0]  %s3, 256, %s470, [#allocation9], 64, 64, 4
        $region24: #{tpu_custom_call.1} parent=11 // pred_fallthru
          _
        // Predicated region
        $region25: #{tpu_custom_call.1} parent=11 // pred_check
          %p476 = pneg %p144
        $region26: #{tpu_custom_call.1} parent=11 // pred_check_branch
          %478 = sbr.rel (%p476) target = $region28
        $region27: #{tpu_custom_call.1} parent=11 // pred_region
          %s480 = ssub.s32 256, 256
          %481 = vsyncadd [#allocation9], %s480
          %s482 = sshll.u32 [#allocation10], 4
          %s483 = int_to_ptr.vmem [resolvable:$true] %s482
          %488 = dma.hbm_to_vmem [thread:$0]  %s4, 256, %s483, [#allocation9], 64, 64, 4
        $region28: #{tpu_custom_call.1} parent=11 // pred_fallthru
          _
        // Predicated region
        $region29: #{tpu_custom_call.1} parent=11 // pred_check
          %p489 = pneg %p165
        $region30: #{tpu_custom_call.1} parent=11 // pred_check_branch
          %491 = sbr.rel (%p489) target = $region32
        $region31: #{tpu_custom_call.1} parent=11 // pred_region
          %s493 = ssub.s32 256, 256
          %494 = vsyncadd [#allocation12], %s493
          %s495 = sshll.u32 [#allocation11], 4
          %s496 = int_to_ptr.vmem [resolvable:$true] %s495
          %501 = dma.hbm_to_vmem [thread:$0]  %s5, 256, %s496, [#allocation12], 64, 64, 4
        $region32: #{tpu_custom_call.1} parent=11 // pred_fallthru
          _
        // Predicated region
        $region33: #{tpu_custom_call.1} parent=11 // pred_check
          %p502 = pneg %p186
        $region34: #{tpu_custom_call.1} parent=11 // pred_check_branch
          %504 = sbr.rel (%p502) target = $region36
        $region35: #{tpu_custom_call.1} parent=11 // pred_region
          _
        $region36: #{tpu_custom_call.1} parent=11 // pred_fallthru
          _
        // Predicated region
        $region37: #{tpu_custom_call.1} parent=11 // pred_check
          %p505 = pneg %p207
        $region38: #{tpu_custom_call.1} parent=11 // pred_check_branch
          %507 = sbr.rel (%p505) target = $region40
        $region39: #{tpu_custom_call.1} parent=11 // pred_region
          %s509 = ssub.s32 512, 512
          %510 = vsyncadd [#allocation12], %s509
          %s511 = sshll.u32 [#allocation13], 4
          %s512 = int_to_ptr.vmem [resolvable:$true] %s511
          %517 = dma.hbm_to_vmem [thread:$0]  %s7, 512, %s512, [#allocation12], 128, 128, 8
        $region40: #{tpu_custom_call.1} parent=11 // pred_fallthru
          _
        // Predicated region
        $region41: #{tpu_custom_call.1} parent=11 // pred_check
          %p518 = pneg %p228
        $region42: #{tpu_custom_call.1} parent=11 // pred_check_branch
          %520 = sbr.rel (%p518) target = $region44
        $region43: #{tpu_custom_call.1} parent=11 // pred_region
          %s522 = ssub.s32 512, 512
          %523 = vsyncadd [#allocation15], %s522
          %s524 = sshll.u32 [#allocation14], 4
          %s525 = int_to_ptr.vmem [resolvable:$true] %s524
          %530 = dma.hbm_to_vmem [thread:$0]  %s8, 512, %s525, [#allocation15], 128, 128, 8
        $region44: #{tpu_custom_call.1} parent=11 // pred_fallthru
          _
        // Predicated region
        $region45: #{tpu_custom_call.1} parent=11 // pred_check
          %p531 = pneg %p249
        $region46: #{tpu_custom_call.1} parent=11 // pred_check_branch
          %533 = sbr.rel (%p531) target = $region48
        $region47: #{tpu_custom_call.1} parent=11 // pred_region
          %s535 = ssub.s32 512, 512
          %536 = vsyncadd [#allocation15], %s535
          %s537 = sshll.u32 [#allocation16], 4
          %s538 = int_to_ptr.vmem [resolvable:$true] %s537
          %543 = dma.hbm_to_vmem [thread:$0]  %s9, 512, %s538, [#allocation15], 128, 128, 8
        $region48: #{tpu_custom_call.1} parent=11 // pred_fallthru
          _
        // Predicated region
        $region49: #{tpu_custom_call.1} parent=11 // pred_check
          %p544 = pneg %p270
        $region50: #{tpu_custom_call.1} parent=11 // pred_check_branch
          %546 = sbr.rel (%p544) target = $region52
        $region51: #{tpu_custom_call.1} parent=11 // pred_region
          %s548 = ssub.s32 512, 512
          %549 = vsyncadd [#allocation18], %s548
          %s550 = sshll.u32 [#allocation17], 4
          %s551 = int_to_ptr.vmem [resolvable:$true] %s550
          %556 = dma.hbm_to_vmem [thread:$0]  %s10, 512, %s551, [#allocation18], 128, 128, 8
        $region52: #{tpu_custom_call.1} parent=11 // pred_fallthru
          _
        // Predicated region
        $region53: #{tpu_custom_call.1} parent=11 // pred_check
          %p557 = pneg %p291
        $region54: #{tpu_custom_call.1} parent=11 // pred_check_branch
          %559 = sbr.rel (%p557) target = $region56
        $region55: #{tpu_custom_call.1} parent=11 // pred_region
          %s561 = ssub.s32 512, 512
          %562 = vsyncadd [#allocation18], %s561
          %s563 = sshll.u32 [#allocation19], 4
          %s564 = int_to_ptr.vmem [resolvable:$true] %s563
          %569 = dma.hbm_to_vmem [thread:$0]  %s11, 512, %s564, [#allocation18], 128, 128, 8
        $region56: #{tpu_custom_call.1} parent=11 // pred_fallthru
          _
        // Predicated region
        $region57: #{tpu_custom_call.1} parent=11 // pred_check
          %p570 = pneg %p312
        $region58: #{tpu_custom_call.1} parent=11 // pred_check_branch
          %572 = sbr.rel (%p570) target = $region60
        $region59: #{tpu_custom_call.1} parent=11 // pred_region
          _
        $region60: #{tpu_custom_call.1} parent=11 // pred_fallthru
          _
        // Predicated region
        $region61: #{tpu_custom_call.1} parent=11 // pred_check
          %p573 = pneg %p333
        $region62: #{tpu_custom_call.1} parent=11 // pred_check_branch
          %575 = sbr.rel (%p573) target = $region64
        $region63: #{tpu_custom_call.1} parent=11 // pred_region
          _
        $region64: #{tpu_custom_call.1} parent=11 // pred_fallthru
          _
        // Predicated region
        $region65: #{tpu_custom_call.1} parent=11 // pred_check
          %p576 = pneg %p354
        $region66: #{tpu_custom_call.1} parent=11 // pred_check_branch
          %578 = sbr.rel (%p576) target = $region68
        $region67: #{tpu_custom_call.1} parent=11 // pred_region
          _
        $region68: #{tpu_custom_call.1} parent=11 // pred_fallthru
          _
        // Predicated region
        $region69: #{tpu_custom_call.1} parent=11 // pred_check
          %p579 = pneg %p375
        $region70: #{tpu_custom_call.1} parent=11 // pred_check_branch
          %581 = sbr.rel (%p579) target = $region72
        $region71: #{tpu_custom_call.1} parent=11 // pred_region
          _
        $region72: #{tpu_custom_call.1} parent=11 // pred_fallthru
          _
        // Predicated region
        $region73: #{tpu_custom_call.1} parent=11 // pred_check
          %p582 = pneg %p396
        $region74: #{tpu_custom_call.1} parent=11 // pred_check_branch
          %584 = sbr.rel (%p582) target = $region76
        $region75: #{tpu_custom_call.1} parent=11 // pred_region
          _
        $region76: #{tpu_custom_call.1} parent=11 // pred_fallthru
          _
      $region12: #{tpu_custom_call.1} parent=5 // pred_fallthru
        _
      %p585 = scmp.lt.s32.totalorder %s34, 2
      // Predicated region
      $region77: #{tpu_custom_call.1} parent=5 // pred_check
        %p586 = pneg %p585
      $region78: #{tpu_custom_call.1} parent=5 // pred_check_branch
        %588 = sbr.rel (%p586) target = $region80
      $region79: #{tpu_custom_call.1} parent=5 // pred_region
        // Predicated region
        $region81: #{tpu_custom_call.1} parent=79 // pred_check
          %p589 = pneg %p54
        $region82: #{tpu_custom_call.1} parent=79 // pred_check_branch
          %591 = sbr.rel (%p589) target = $region84
        $region83: #{tpu_custom_call.1} parent=79 // pred_region
          %s592 = sand.u32 %s44, 1
          %s593 = scalar_lea.sflag [#allocation3], %s592
          %s594 = sand.u32 %s44, 1
          %s595 = smul.addr %s594, 32
          %s596 = scalar_lea.vmem [#allocation2], %s595
          %s597 = smul.u32 4, %s34
          %s599 = ssub.s32 512, 512
          %600 = vsyncadd %s593, %s599
          %s601 = smul.addr %s597, 128
          %s602 = scalar_lea.hbm %s0, %s601
          %s603 = sshll.u32 %s596, 4
          %s604 = int_to_ptr.vmem [resolvable:$true] %s603
          %609 = dma.hbm_to_vmem [thread:$0]  %s602, 512, %s604, %s593, 128, 128, 8
        $region84: #{tpu_custom_call.1} parent=79 // pred_fallthru
          _
      $region80: #{tpu_custom_call.1} parent=5 // pred_fallthru
        _
      %p610 = scmp.le.s32.totalorder 1, %s34
      %p611 = scmp.lt.s32.totalorder %s34, 3
      %p612 = pnand %p610, %p611
      %p613 = pneg %p612
      // Predicated region
      $region85: #{tpu_custom_call.1} parent=5 // pred_check
        _
      $region86: #{tpu_custom_call.1} parent=5 // pred_check_branch
        %615 = sbr.rel (%p612) target = $region88
      $region87: #{tpu_custom_call.1} parent=5 // pred_region
        %s616 = ssub.s32 %s34, 1
        %s617 = sand.u32 %s47, 1
        %s618 = scalar_lea.sflag [#allocation3], %s617
        %s619 = sand.u32 %s47, 1
        %s620 = smul.addr %s619, 32
        %s621 = scalar_lea.vmem [#allocation2], %s620
        // Predicated region
        $region89: #{tpu_custom_call.1} parent=87 // pred_check
          %p622 = pneg %p60
        $region90: #{tpu_custom_call.1} parent=87 // pred_check_branch
          %624 = sbr.rel (%p622) target = $region92
        $region91: #{tpu_custom_call.1} parent=87 // pred_region
          %625 = dma.done %s618, 512
        $region92: #{tpu_custom_call.1} parent=87 // pred_fallthru
          _
        // Predicated region
        $region93: #{tpu_custom_call.1} parent=87 // pred_check
          %p626 = pneg %p81
        $region94: #{tpu_custom_call.1} parent=87 // pred_check_branch
          %628 = sbr.rel (%p626) target = $region96
        $region95: #{tpu_custom_call.1} parent=87 // pred_region
          %629 = dma.done [#allocation6], 256
        $region96: #{tpu_custom_call.1} parent=87 // pred_fallthru
          _
        // Predicated region
        $region97: #{tpu_custom_call.1} parent=87 // pred_check
          %p630 = pneg %p102
        $region98: #{tpu_custom_call.1} parent=87 // pred_check_branch
          %632 = sbr.rel (%p630) target = $region100
        $region99: #{tpu_custom_call.1} parent=87 // pred_region
          %633 = dma.done [#allocation6], 256
        $region100: #{tpu_custom_call.1} parent=87 // pred_fallthru
          _
        // Predicated region
        $region101: #{tpu_custom_call.1} parent=87 // pred_check
          %p634 = pneg %p123
        $region102: #{tpu_custom_call.1} parent=87 // pred_check_branch
          %636 = sbr.rel (%p634) target = $region104
        $region103: #{tpu_custom_call.1} parent=87 // pred_region
          %637 = dma.done [#allocation9], 256
        $region104: #{tpu_custom_call.1} parent=87 // pred_fallthru
          _
        // Predicated region
        $region105: #{tpu_custom_call.1} parent=87 // pred_check
          %p638 = pneg %p144
        $region106: #{tpu_custom_call.1} parent=87 // pred_check_branch
          %640 = sbr.rel (%p638) target = $region108
        $region107: #{tpu_custom_call.1} parent=87 // pred_region
          %641 = dma.done [#allocation9], 256
        $region108: #{tpu_custom_call.1} parent=87 // pred_fallthru
          _
        // Predicated region
        $region109: #{tpu_custom_call.1} parent=87 // pred_check
          %p642 = pneg %p165
        $region110: #{tpu_custom_call.1} parent=87 // pred_check_branch
          %644 = sbr.rel (%p642) target = $region112
        $region111: #{tpu_custom_call.1} parent=87 // pred_region
          %645 = dma.done [#allocation12], 256
        $region112: #{tpu_custom_call.1} parent=87 // pred_fallthru
          _
        // Predicated region
        $region113: #{tpu_custom_call.1} parent=87 // pred_check
          %p646 = pneg %p207
        $region114: #{tpu_custom_call.1} parent=87 // pred_check_branch
          %648 = sbr.rel (%p646) target = $region116
        $region115: #{tpu_custom_call.1} parent=87 // pred_region
          %649 = dma.done [#allocation12], 512
        $region116: #{tpu_custom_call.1} parent=87 // pred_fallthru
          _
        // Predicated region
        $region117: #{tpu_custom_call.1} parent=87 // pred_check
          %p650 = pneg %p228
        $region118: #{tpu_custom_call.1} parent=87 // pred_check_branch
          %652 = sbr.rel (%p650) target = $region120
        $region119: #{tpu_custom_call.1} parent=87 // pred_region
          %653 = dma.done [#allocation15], 512
        $region120: #{tpu_custom_call.1} parent=87 // pred_fallthru
          _
        // Predicated region
        $region121: #{tpu_custom_call.1} parent=87 // pred_check
          %p654 = pneg %p249
        $region122: #{tpu_custom_call.1} parent=87 // pred_check_branch
          %656 = sbr.rel (%p654) target = $region124
        $region123: #{tpu_custom_call.1} parent=87 // pred_region
          %657 = dma.done [#allocation15], 512
        $region124: #{tpu_custom_call.1} parent=87 // pred_fallthru
          _
        // Predicated region
        $region125: #{tpu_custom_call.1} parent=87 // pred_check
          %p658 = pneg %p270
        $region126: #{tpu_custom_call.1} parent=87 // pred_check_branch
          %660 = sbr.rel (%p658) target = $region128
        $region127: #{tpu_custom_call.1} parent=87 // pred_region
          %661 = dma.done [#allocation18], 512
        $region128: #{tpu_custom_call.1} parent=87 // pred_fallthru
          _
        // Predicated region
        $region129: #{tpu_custom_call.1} parent=87 // pred_check
          %p662 = pneg %p291
        $region130: #{tpu_custom_call.1} parent=87 // pred_check_branch
          %664 = sbr.rel (%p662) target = $region132
        $region131: #{tpu_custom_call.1} parent=87 // pred_region
          %665 = dma.done [#allocation18], 512
        $region132: #{tpu_custom_call.1} parent=87 // pred_fallthru
          _
        %s666 = sand.u32 %s47, 1
        %s667 = scalar_lea.sflag [#allocation3], %s666
        %s668 = sand.u32 %s47, 1
        %s669 = smul.addr %s668, 32
        %s670 = scalar_lea.vmem [#allocation2], %s669
        %p671 = pneg %p60
        %p672 = pneg %p57
        %p673 = pneg %p81
        %p674 = pneg %p78
        %p675 = pneg %p102
        %p676 = pneg %p99
        %p677 = pneg %p123
        %p678 = pneg %p120
        %p679 = pneg %p144
        %p680 = pneg %p141
        %p681 = pneg %p165
        %p682 = pneg %p162
        %p683 = pneg %p186
        %p684 = pneg %p183
        %p685 = pneg %p207
        %p686 = pneg %p204
        %p687 = pneg %p228
        %p688 = pneg %p225
        %p689 = pneg %p249
        %p690 = pneg %p246
        %p691 = pneg %p270
        %p692 = pneg %p267
        %p693 = pneg %p291
        %p694 = pneg %p288
        %p695 = pneg %p312
        %p696 = pneg %p309
        %p697 = pneg %p333
        %p698 = pneg %p330
        %p699 = pneg %p354
        %p700 = pneg %p351
        %p701 = pneg %p375
        %p702 = pneg %p372
        %p703 = pneg %p396
        %p704 = pneg %p393
        %p705 = pneg %p422
        %p706 = pneg %p419
        %s707 = sand.u32 %s409, 1
        %s708 = scalar_lea.sflag [#allocation4], %s707
        %s709 = sand.u32 %s409, 1
        %s710 = smul.addr %s709, 32
        %s711 = scalar_lea.vmem [#allocation20], %s710
        %s712 = smul.u32 4, %s39
        %s713 = smul.u32 4, %s39
        %v715 = vld [vmem:[%s621] sm:$0xff]
        %v716 = vld [vmem:[%s621 + $0x8] sm:$0xff]
        %v717 = vld [vmem:[%s621 + $0x10] sm:$0xff]
        %v718 = vld [vmem:[%s621 + $0x18] sm:$0xff]
        %v719 = vpack.c.bf16 %v716, %v715
        %v720 = vpack.c.bf16 %v718, %v717
        %v721 = vld [vmem:[#allocation5] sm:$0xf]
        %v722 = vld [vmem:[#allocation5 + $0x4] sm:$0xf]
        %v723 = vld [vmem:[#allocation5 + $0x8] sm:$0xf]
        %v724 = vld [vmem:[#allocation5 + $0xc] sm:$0xf]
        %v729 = vunpack.c.l.b16 %v721
        %v730 = vunpack.c.l.b16 %v722
        %v731 = vunpack.c.l.b16 %v723
        %v732 = vunpack.c.l.b16 %v724
        %v733 = vpack.c.b16 %v730, %v729
        %v734 = vpack.c.b16 %v732, %v731
        %vm737 = vcmask 261120
        %v739 = vsel %vm737, %v719, 0
        %v742 = vsel %vm737, %v720, 0
        %744 = vmatprep.subr.bf16.mxu0 0
        %745 = vmatpush1.bf16.msra.mxu0 0
        %746 = vmatprep.subr.bf16.mxu0 0
        %747 = vmatpush1.bf16.msra.mxu0 0
        %748 = vmatprep.subr.bf16.mxu0 0
        %749 = vmatpush1.bf16.msra.mxu0 0
        %750 = vmatprep.subr.bf16.mxu0 0
        %751 = vmatpush1.bf16.msra.mxu0 0
        %752 = vmatprep.subr.bf16.mxu0 0
        %753 = vmatpush1.bf16.msra.mxu0 0
        %754 = vmatprep.subr.bf16.mxu0 0
        %755 = vmatpush1.bf16.msra.mxu0 0
        %756 = vmatprep.subr.bf16.mxu0 0
        %757 = vmatpush1.bf16.msra.mxu0 %v734
        %758 = vmatprep.subr.bf16.mxu0 0
        %759 = vmatpush1.bf16.msra.mxu0 %v733
        %760 = vmatprep.subr.bf16.mxu0 0
        %761 = vmatpush2.bf16.msra.mxu0 0
        %762 = vmatprep.subr.bf16.mxu0 0
        %763 = vmatpush2.bf16.msra.mxu0 0
        %764 = vmatprep.subr.bf16.mxu0 0
        %765 = vmatpush2.bf16.msra.mxu0 0
        %766 = vmatprep.subr.bf16.mxu0 0
        %767 = vmatpush2.bf16.msra.mxu0 0
        %768 = vmatprep.subr.bf16.mxu0 0
        %769 = vmatpush2.bf16.msra.mxu0 0
        %770 = vmatprep.subr.bf16.mxu0 0
        %771 = vmatpush2.bf16.msra.mxu0 0
        %772 = vmatprep.subr.bf16.mxu0 0
        %773 = vmatpush2.bf16.msra.mxu0 0
        %774 = vmatprep.subr.bf16.mxu0 0
        %775 = vmatpush2.bf16.msra.mxu0 0
        %776 = vmatprep.mubr.bf16.mxu0 0
        %777 = vmatmul.mubr.bf16.gmra.mxu0 %v739
        %v778 = vpop.f32.mrf.mxu0
        %v779 = vadd.f32 0.0, %v778
        %v780 = vpop.f32.mrf.mxu0
        %v781 = vpop.f32.mrf.mxu0
        %v782 = vadd.f32 0.0, %v781
        %v783 = vpop.f32.mrf.mxu0
        %784 = vmatprep.mubr.bf16.mxu0 0
        %785 = vmatmul.mubr.bf16.gmra.mxu0 %v742
        %v786 = vpop.f32.mrf.mxu0
        %v787 = vadd.f32 0.0, %v786
        %v788 = vpop.f32.mrf.mxu0
        %v789 = vpop.f32.mrf.mxu0
        %v790 = vadd.f32 0.0, %v789
        %v791 = vpop.f32.mrf.mxu0
        %792 = vdwg.mxu0
        %v793 = vld [vmem:[#allocation7] sm:$0xf]
        %v794 = vld [vmem:[#allocation7 + $0x4] sm:$0xf]
        %v795 = vld [vmem:[#allocation7 + $0x8] sm:$0xf]
        %v796 = vld [vmem:[#allocation7 + $0xc] sm:$0xf]
        %v801 = vunpack.c.l.b16 %v793
        %v802 = vunpack.c.l.b16 %v794
        %v803 = vunpack.c.l.b16 %v795
        %v804 = vunpack.c.l.b16 %v796
        %v805 = vpack.c.b16 %v802, %v801
        %v806 = vpack.c.b16 %v804, %v803
        %809 = vmatprep.subr.bf16.mxu0 0
        %810 = vmatpush1.bf16.msra.mxu0 0
        %811 = vmatprep.subr.bf16.mxu0 0
        %812 = vmatpush1.bf16.msra.mxu0 0
        %813 = vmatprep.subr.bf16.mxu0 0
        %814 = vmatpush1.bf16.msra.mxu0 0
        %815 = vmatprep.subr.bf16.mxu0 0
        %816 = vmatpush1.bf16.msra.mxu0 0
        %817 = vmatprep.subr.bf16.mxu0 0
        %818 = vmatpush1.bf16.msra.mxu0 0
        %819 = vmatprep.subr.bf16.mxu0 0
        %820 = vmatpush1.bf16.msra.mxu0 0
        %821 = vmatprep.subr.bf16.mxu0 0
        %822 = vmatpush1.bf16.msra.mxu0 %v806
        %823 = vmatprep.subr.bf16.mxu0 0
        %824 = vmatpush1.bf16.msra.mxu0 %v805
        %825 = vmatprep.subr.bf16.mxu0 0
        %826 = vmatpush2.bf16.msra.mxu0 0
        %827 = vmatprep.subr.bf16.mxu0 0
        %828 = vmatpush2.bf16.msra.mxu0 0
        %829 = vmatprep.subr.bf16.mxu0 0
        %830 = vmatpush2.bf16.msra.mxu0 0
        %831 = vmatprep.subr.bf16.mxu0 0
        %832 = vmatpush2.bf16.msra.mxu0 0
        %833 = vmatprep.subr.bf16.mxu0 0
        %834 = vmatpush2.bf16.msra.mxu0 0
        %835 = vmatprep.subr.bf16.mxu0 0
        %836 = vmatpush2.bf16.msra.mxu0 0
        %837 = vmatprep.subr.bf16.mxu0 0
        %838 = vmatpush2.bf16.msra.mxu0 0
        %839 = vmatprep.subr.bf16.mxu0 0
        %840 = vmatpush2.bf16.msra.mxu0 0
        %841 = vmatprep.mubr.bf16.mxu0 0
        %842 = vmatmul.mubr.bf16.gmra.mxu0 %v739
        %v843 = vpop.f32.mrf.mxu0
        %v844 = vadd.f32 0.0, %v843
        %v845 = vpop.f32.mrf.mxu0
        %v846 = vpop.f32.mrf.mxu0
        %v847 = vadd.f32 0.0, %v846
        %v848 = vpop.f32.mrf.mxu0
        %849 = vmatprep.mubr.bf16.mxu0 0
        %850 = vmatmul.mubr.bf16.gmra.mxu0 %v742
        %v851 = vpop.f32.mrf.mxu0
        %v852 = vadd.f32 0.0, %v851
        %v853 = vpop.f32.mrf.mxu0
        %v854 = vpop.f32.mrf.mxu0
        %v855 = vadd.f32 0.0, %v854
        %v856 = vpop.f32.mrf.mxu0
        %857 = vdwg.mxu0
        %v858 = vld [vmem:[#allocation8] sm:$0xf]
        %v859 = vld [vmem:[#allocation8 + $0x4] sm:$0xf]
        %v860 = vld [vmem:[#allocation8 + $0x8] sm:$0xf]
        %v861 = vld [vmem:[#allocation8 + $0xc] sm:$0xf]
        %v866 = vunpack.c.l.b16 %v858
        %v867 = vunpack.c.l.b16 %v859
        %v868 = vunpack.c.l.b16 %v860
        %v869 = vunpack.c.l.b16 %v861
        %v870 = vpack.c.b16 %v867, %v866
        %v871 = vpack.c.b16 %v869, %v868
        %874 = vmatprep.subr.bf16.mxu0 0
        %875 = vmatpush1.bf16.msra.mxu0 0
        %876 = vmatprep.subr.bf16.mxu0 0
        %877 = vmatpush1.bf16.msra.mxu0 0
        %878 = vmatprep.subr.bf16.mxu0 0
        %879 = vmatpush1.bf16.msra.mxu0 0
        %880 = vmatprep.subr.bf16.mxu0 0
        %881 = vmatpush1.bf16.msra.mxu0 0
        %882 = vmatprep.subr.bf16.mxu0 0
        %883 = vmatpush1.bf16.msra.mxu0 0
        %884 = vmatprep.subr.bf16.mxu0 0
        %885 = vmatpush1.bf16.msra.mxu0 0
        %886 = vmatprep.subr.bf16.mxu0 0
        %887 = vmatpush1.bf16.msra.mxu0 %v871
        %888 = vmatprep.subr.bf16.mxu0 0
        %889 = vmatpush1.bf16.msra.mxu0 %v870
        %890 = vmatprep.subr.bf16.mxu0 0
        %891 = vmatpush2.bf16.msra.mxu0 0
        %892 = vmatprep.subr.bf16.mxu0 0
        %893 = vmatpush2.bf16.msra.mxu0 0
        %894 = vmatprep.subr.bf16.mxu0 0
        %895 = vmatpush2.bf16.msra.mxu0 0
        %896 = vmatprep.subr.bf16.mxu0 0
        %897 = vmatpush2.bf16.msra.mxu0 0
        %898 = vmatprep.subr.bf16.mxu0 0
        %899 = vmatpush2.bf16.msra.mxu0 0
        %900 = vmatprep.subr.bf16.mxu0 0
        %901 = vmatpush2.bf16.msra.mxu0 0
        %902 = vmatprep.subr.bf16.mxu0 0
        %903 = vmatpush2.bf16.msra.mxu0 0
        %904 = vmatprep.subr.bf16.mxu0 0
        %905 = vmatpush2.bf16.msra.mxu0 0
        %906 = vmatprep.mubr.bf16.mxu0 0
        %907 = vmatmul.mubr.bf16.gmra.mxu0 %v739
        %v908 = vpop.f32.mrf.mxu0
        %v909 = vadd.f32 0.0, %v908
        %v910 = vpop.f32.mrf.mxu0
        %v911 = vpop.f32.mrf.mxu0
        %v912 = vadd.f32 0.0, %v911
        %v913 = vpop.f32.mrf.mxu0
        %914 = vmatprep.mubr.bf16.mxu0 0
        %915 = vmatmul.mubr.bf16.gmra.mxu0 %v742
        %v916 = vpop.f32.mrf.mxu0
        %v917 = vadd.f32 0.0, %v916
        %v918 = vpop.f32.mrf.mxu0
        %v919 = vpop.f32.mrf.mxu0
        %v920 = vadd.f32 0.0, %v919
        %v921 = vpop.f32.mrf.mxu0
        %922 = vdwg.mxu0
        %v923 = vld [vmem:[#allocation10] sm:$0xf]
        %v924 = vld [vmem:[#allocation10 + $0x4] sm:$0xf]
        %v925 = vld [vmem:[#allocation10 + $0x8] sm:$0xf]
        %v926 = vld [vmem:[#allocation10 + $0xc] sm:$0xf]
        %v931 = vunpack.c.l.b16 %v923
        %v932 = vunpack.c.l.b16 %v924
        %v933 = vunpack.c.l.b16 %v925
        %v934 = vunpack.c.l.b16 %v926
        %v935 = vpack.c.b16 %v932, %v931
        %v936 = vpack.c.b16 %v934, %v933
        %939 = vmatprep.subr.bf16.mxu0 0
        %940 = vmatpush1.bf16.msra.mxu0 0
        %941 = vmatprep.subr.bf16.mxu0 0
        %942 = vmatpush1.bf16.msra.mxu0 0
        %943 = vmatprep.subr.bf16.mxu0 0
        %944 = vmatpush1.bf16.msra.mxu0 0
        %945 = vmatprep.subr.bf16.mxu0 0
        %946 = vmatpush1.bf16.msra.mxu0 0
        %947 = vmatprep.subr.bf16.mxu0 0
        %948 = vmatpush1.bf16.msra.mxu0 0
        %949 = vmatprep.subr.bf16.mxu0 0
        %950 = vmatpush1.bf16.msra.mxu0 0
        %951 = vmatprep.subr.bf16.mxu0 0
        %952 = vmatpush1.bf16.msra.mxu0 %v936
        %953 = vmatprep.subr.bf16.mxu0 0
        %954 = vmatpush1.bf16.msra.mxu0 %v935
        %955 = vmatprep.subr.bf16.mxu0 0
        %956 = vmatpush2.bf16.msra.mxu0 0
        %957 = vmatprep.subr.bf16.mxu0 0
        %958 = vmatpush2.bf16.msra.mxu0 0
        %959 = vmatprep.subr.bf16.mxu0 0
        %960 = vmatpush2.bf16.msra.mxu0 0
        %961 = vmatprep.subr.bf16.mxu0 0
        %962 = vmatpush2.bf16.msra.mxu0 0
        %963 = vmatprep.subr.bf16.mxu0 0
        %964 = vmatpush2.bf16.msra.mxu0 0
        %965 = vmatprep.subr.bf16.mxu0 0
        %966 = vmatpush2.bf16.msra.mxu0 0
        %967 = vmatprep.subr.bf16.mxu0 0
        %968 = vmatpush2.bf16.msra.mxu0 0
        %969 = vmatprep.subr.bf16.mxu0 0
        %970 = vmatpush2.bf16.msra.mxu0 0
        %971 = vmatprep.mubr.bf16.mxu0 0
        %972 = vmatmul.mubr.bf16.gmra.mxu0 %v739
        %v973 = vpop.f32.mrf.mxu0
        %v974 = vadd.f32 0.0, %v973
        %v975 = vpop.f32.mrf.mxu0
        %v976 = vpop.f32.mrf.mxu0
        %v977 = vadd.f32 0.0, %v976
        %v978 = vpop.f32.mrf.mxu0
        %979 = vmatprep.mubr.bf16.mxu0 0
        %980 = vmatmul.mubr.bf16.gmra.mxu0 %v742
        %v981 = vpop.f32.mrf.mxu0
        %v982 = vadd.f32 0.0, %v981
        %v983 = vpop.f32.mrf.mxu0
        %v984 = vpop.f32.mrf.mxu0
        %v985 = vadd.f32 0.0, %v984
        %v986 = vpop.f32.mrf.mxu0
        %987 = vdwg.mxu0
        %v988 = vld [vmem:[%s6] sm:$0xff]
        %v989 = vld [vmem:[%s6 + $0x8] sm:$0xff]
        %v990 = vld [vmem:[%s6 + $0x10] sm:$0xff]
        %v991 = vld [vmem:[%s6 + $0x18] sm:$0xff]
        %v992 = vld [vmem:[#allocation13] sm:$0xff]
        %v993 = vld [vmem:[#allocation13 + $0x8] sm:$0xff]
        %v994 = vld [vmem:[#allocation13 + $0x10] sm:$0xff]
        %v995 = vld [vmem:[#allocation13 + $0x18] sm:$0xff]
        %v996 = vld [vmem:[#allocation14] sm:$0xff]
        %v997 = vld [vmem:[#allocation14 + $0x8] sm:$0xff]
        %v998 = vld [vmem:[#allocation14 + $0x10] sm:$0xff]
        %v999 = vld [vmem:[#allocation14 + $0x18] sm:$0xff]
        %1004 = vrot.lane.b32.xlu0 %v779, 127
        %v1005 = vpop.permute.xlu0 %1004
        %1006 = vrot.lane.b32.xlu0 %v782, 127
        %v1007 = vpop.permute.xlu0 %1006
        %1008 = vrot.lane.b32.xlu0 %v787, 127
        %v1009 = vpop.permute.xlu0 %1008
        %1010 = vrot.lane.b32.xlu0 %v790, 127
        %v1011 = vpop.permute.xlu0 %1010
        %1016 = vrot.lane.b32.xlu0 %v779, 31
        %v1017 = vpop.permute.xlu0 %1016
        %1018 = vrot.lane.b32.xlu0 %v782, 31
        %v1019 = vpop.permute.xlu0 %1018
        %1020 = vrot.lane.b32.xlu0 %v787, 31
        %v1021 = vpop.permute.xlu0 %1020
        %1022 = vrot.lane.b32.xlu0 %v790, 31
        %v1023 = vpop.permute.xlu0 %1022
        %vm1028 = vcmask 252928
        %v1029 = vsel %vm1028, %v1005, %v1017
        %v1030 = vsel %vm1028, %v1007, %v1019
        %v1031 = vsel %vm1028, %v1009, %v1021
        %v1032 = vsel %vm1028, %v1011, %v1023
        %v1033 = vmul.f32 %v1029, %v992
        %v1034 = vmul.f32 %v1030, %v993
        %v1035 = vmul.f32 %v1031, %v994
        %v1036 = vmul.f32 %v1032, %v995
        %1037 = vrot.lane.b32.xlu0 %v779, 97
        %v1038 = vpop.permute.xlu0 %1037
        %1039 = vrot.lane.b32.xlu0 %v782, 97
        %v1040 = vpop.permute.xlu0 %1039
        %1041 = vrot.lane.b32.xlu0 %v787, 97
        %v1042 = vpop.permute.xlu0 %1041
        %1043 = vrot.lane.b32.xlu0 %v790, 97
        %v1044 = vpop.permute.xlu0 %1043
        %1049 = vrot.lane.b32.xlu0 %v779, 1
        %v1050 = vpop.permute.xlu0 %1049
        %1051 = vrot.lane.b32.xlu0 %v782, 1
        %v1052 = vpop.permute.xlu0 %1051
        %1053 = vrot.lane.b32.xlu0 %v787, 1
        %v1054 = vpop.permute.xlu0 %1053
        %1055 = vrot.lane.b32.xlu0 %v790, 1
        %v1056 = vpop.permute.xlu0 %1055
        %vm1061 = vcmask 7168
        %v1062 = vsel %vm1061, %v1038, %v1050
        %v1063 = vsel %vm1061, %v1040, %v1052
        %v1064 = vsel %vm1061, %v1042, %v1054
        %v1065 = vsel %vm1061, %v1044, %v1056
        %v1066 = vmul.f32 %v1062, %v996
        %v1067 = vmul.f32 %v1063, %v997
        %v1068 = vmul.f32 %v1064, %v998
        %v1069 = vmul.f32 %v1065, %v999
        %v1070 = vadd.f32 %v1033, %v1066
        %v1071 = vadd.f32 %v1034, %v1067
        %v1072 = vadd.f32 %v1035, %v1068
        %v1073 = vadd.f32 %v1036, %v1069
        %v1074 = vmul.f32 %v779, %v988
        %v1075 = vmul.f32 %v782, %v989
        %v1076 = vmul.f32 %v787, %v990
        %v1077 = vmul.f32 %v790, %v991
        %v1078 = vadd.f32 %v1074, %v1070
        %v1079 = vadd.f32 %v1075, %v1071
        %v1080 = vadd.f32 %v1076, %v1072
        %v1081 = vadd.f32 %v1077, %v1073
        %v1082 = vld [vmem:[#allocation16] sm:$0xff]
        %v1083 = vld [vmem:[#allocation16 + $0x8] sm:$0xff]
        %v1084 = vld [vmem:[#allocation16 + $0x10] sm:$0xff]
        %v1085 = vld [vmem:[#allocation16 + $0x18] sm:$0xff]
        %v1086 = vld [vmem:[#allocation17] sm:$0xff]
        %v1087 = vld [vmem:[#allocation17 + $0x8] sm:$0xff]
        %v1088 = vld [vmem:[#allocation17 + $0x10] sm:$0xff]
        %v1089 = vld [vmem:[#allocation17 + $0x18] sm:$0xff]
        %v1090 = vld [vmem:[#allocation19] sm:$0xff]
        %v1091 = vld [vmem:[#allocation19 + $0x8] sm:$0xff]
        %v1092 = vld [vmem:[#allocation19 + $0x10] sm:$0xff]
        %v1093 = vld [vmem:[#allocation19 + $0x18] sm:$0xff]
        %1098 = vrot.lane.b32.xlu0 %v844, 127
        %v1099 = vpop.permute.xlu0 %1098
        %1100 = vrot.lane.b32.xlu0 %v847, 127
        %v1101 = vpop.permute.xlu0 %1100
        %1102 = vrot.lane.b32.xlu0 %v852, 127
        %v1103 = vpop.permute.xlu0 %1102
        %1104 = vrot.lane.b32.xlu0 %v855, 127
        %v1105 = vpop.permute.xlu0 %1104
        %1110 = vrot.lane.b32.xlu0 %v844, 31
        %v1111 = vpop.permute.xlu0 %1110
        %1112 = vrot.lane.b32.xlu0 %v847, 31
        %v1113 = vpop.permute.xlu0 %1112
        %1114 = vrot.lane.b32.xlu0 %v852, 31
        %v1115 = vpop.permute.xlu0 %1114
        %1116 = vrot.lane.b32.xlu0 %v855, 31
        %v1117 = vpop.permute.xlu0 %1116
        %v1122 = vsel %vm1028, %v1099, %v1111
        %v1123 = vsel %vm1028, %v1101, %v1113
        %v1124 = vsel %vm1028, %v1103, %v1115
        %v1125 = vsel %vm1028, %v1105, %v1117
        %v1126 = vmul.f32 %v1122, %v1086
        %v1127 = vmul.f32 %v1123, %v1087
        %v1128 = vmul.f32 %v1124, %v1088
        %v1129 = vmul.f32 %v1125, %v1089
        %1130 = vrot.lane.b32.xlu0 %v844, 97
        %v1131 = vpop.permute.xlu0 %1130
        %1132 = vrot.lane.b32.xlu0 %v847, 97
        %v1133 = vpop.permute.xlu0 %1132
        %1134 = vrot.lane.b32.xlu0 %v852, 97
        %v1135 = vpop.permute.xlu0 %1134
        %1136 = vrot.lane.b32.xlu0 %v855, 97
        %v1137 = vpop.permute.xlu0 %1136
        %1142 = vrot.lane.b32.xlu0 %v844, 1
        %v1143 = vpop.permute.xlu0 %1142
        %1144 = vrot.lane.b32.xlu0 %v847, 1
        %v1145 = vpop.permute.xlu0 %1144
        %1146 = vrot.lane.b32.xlu0 %v852, 1
        %v1147 = vpop.permute.xlu0 %1146
        %1148 = vrot.lane.b32.xlu0 %v855, 1
        %v1149 = vpop.permute.xlu0 %1148
        %v1154 = vsel %vm1061, %v1131, %v1143
        %v1155 = vsel %vm1061, %v1133, %v1145
        %v1156 = vsel %vm1061, %v1135, %v1147
        %v1157 = vsel %vm1061, %v1137, %v1149
        %v1158 = vmul.f32 %v1154, %v1090
        %v1159 = vmul.f32 %v1155, %v1091
        %v1160 = vmul.f32 %v1156, %v1092
        %v1161 = vmul.f32 %v1157, %v1093
        %v1162 = vadd.f32 %v1126, %v1158
        %v1163 = vadd.f32 %v1127, %v1159
        %v1164 = vadd.f32 %v1128, %v1160
        %v1165 = vadd.f32 %v1129, %v1161
        %v1166 = vmul.f32 %v844, %v1082
        %v1167 = vmul.f32 %v847, %v1083
        %v1168 = vmul.f32 %v852, %v1084
        %v1169 = vmul.f32 %v855, %v1085
        %v1170 = vadd.f32 %v1166, %v1162
        %v1171 = vadd.f32 %v1167, %v1163
        %v1172 = vadd.f32 %v1168, %v1164
        %v1173 = vadd.f32 %v1169, %v1165
        %v1174 = vld [vmem:[%s12] sm:$0xf]
        %v1175 = vlaneseq
        %v1176 = vshrl.u32 %v1175, 7
        %v1177 = vsub.s32 0, %v1176
        %v1178 = vrot.slane %v1174, %v1177
        %v1179 = vmul.f32 %v1170, %v1178
        %v1180 = vmul.f32 %v1171, %v1178
        %v1181 = vmul.f32 %v1172, %v1178
        %v1182 = vmul.f32 %v1173, %v1178
        %v1183 = vlaneseq
        %v1184 = vshrl.u32 %v1183, 7
        %v1185 = vsub.s32 1, %v1184
        %v1186 = vrot.slane %v1174, %v1185
        %v1187 = vmul.f32 %v1170, %v1186
        %v1188 = vmul.f32 %v1171, %v1186
        %v1189 = vmul.f32 %v1172, %v1186
        %v1190 = vmul.f32 %v1173, %v1186
        %v1191 = vlaneseq
        %v1192 = vshrl.u32 %v1191, 7
        %v1193 = vsub.s32 2, %v1192
        %v1194 = vrot.slane %v1174, %v1193
        %v1195 = vmul.f32 %v1170, %v1194
        %v1196 = vmul.f32 %v1171, %v1194
        %v1197 = vmul.f32 %v1172, %v1194
        %v1198 = vmul.f32 %v1173, %v1194
        %v1199 = vlaneseq
        %v1200 = vshrl.u32 %v1199, 7
        %v1201 = vsub.s32 3, %v1200
        %v1202 = vrot.slane %v1174, %v1201
        %v1203 = vmul.f32 %v1170, %v1202
        %v1204 = vmul.f32 %v1171, %v1202
        %v1205 = vmul.f32 %v1172, %v1202
        %v1206 = vmul.f32 %v1173, %v1202
        %v1207 = vmul.f32 %v909, %v1178
        %v1208 = vmul.f32 %v912, %v1178
        %v1209 = vmul.f32 %v917, %v1178
        %v1210 = vmul.f32 %v920, %v1178
        %v1211 = vmul.f32 %v909, %v1186
        %v1212 = vmul.f32 %v912, %v1186
        %v1213 = vmul.f32 %v917, %v1186
        %v1214 = vmul.f32 %v920, %v1186
        %v1215 = vmul.f32 %v909, %v1194
        %v1216 = vmul.f32 %v912, %v1194
        %v1217 = vmul.f32 %v917, %v1194
        %v1218 = vmul.f32 %v920, %v1194
        %v1219 = vmul.f32 %v909, %v1202
        %v1220 = vmul.f32 %v912, %v1202
        %v1221 = vmul.f32 %v917, %v1202
        %v1222 = vmul.f32 %v920, %v1202
        %v1223 = vld [vmem:[%s14] sm:$0xff]
        %v1225 = vsel %vm737, %v1078, 0
        %v1228 = vsel %vm737, %v1179, 0
        %v1231 = vsel %vm737, %v1187, 0
        %v1234 = vsel %vm737, %v1195, 0
        %v1237 = vsel %vm737, %v1203, 0
        %1239 = vmatprep.subr.mxu0 0.0
        %1240 = vmatpush1.xpose.msra.mxu0 0.0
        %1241 = vmatprep.subr.mxu0 0.0
        %1242 = vmatpush1.xpose.msra.mxu0 0.0
        %1243 = vmatprep.subr.mxu0 0.0
        %1244 = vmatpush1.xpose.msra.mxu0 0.0
        %1245 = vmatprep.subr.mxu0 0.0
        %1246 = vmatpush1.xpose.msra.mxu0 0.0
        %1247 = vmatprep.subr.mxu0 0.0
        %1248 = vmatpush1.xpose.msra.mxu0 0.0
        %1249 = vmatprep.subr.mxu0 0.0
        %1250 = vmatpush1.xpose.msra.mxu0 0.0
        %1251 = vmatprep.subr.mxu0 0.0
        %1252 = vmatpush1.xpose.msra.mxu0 0.0
        %1253 = vmatprep.subr.mxu0 0.0
        %1254 = vmatpush1.xpose.msra.mxu0 0.0
        %1255 = vmatprep.subr.mxu0 0.0
        %1256 = vmatpush1.xpose.msra.mxu0 0.0
        %1257 = vmatprep.subr.mxu0 0.0
        %1258 = vmatpush1.xpose.msra.mxu0 0.0
        %1259 = vmatprep.subr.mxu0 0.0
        %1260 = vmatpush1.xpose.msra.mxu0 0.0
        %1261 = vmatprep.subr.mxu0 0.0
        %1262 = vmatpush1.xpose.msra.mxu0 0.0
        %1263 = vmatprep.subr.mxu0 0.0
        %1264 = vmatpush1.xpose.msra.mxu0 %v1237
        %1265 = vmatprep.subr.mxu0 0.0
        %1266 = vmatpush1.xpose.msra.mxu0 %v1234
        %1267 = vmatprep.subr.mxu0 0.0
        %1268 = vmatpush1.xpose.msra.mxu0 %v1231
        %1269 = vmatprep.subr.mxu0 0.0
        %1270 = vmatpush1.xpose.msra.mxu0 %v1228
        %1271 = vmatprep.subr.mxu0 0.0
        %1272 = vmatpush2.xpose.msra.mxu0 0.0
        %1273 = vmatprep.subr.mxu0 0.0
        %1274 = vmatpush2.xpose.msra.mxu0 0.0
        %1275 = vmatprep.subr.mxu0 0.0
        %1276 = vmatpush2.xpose.msra.mxu0 0.0
        %1277 = vmatprep.subr.mxu0 0.0
        %1278 = vmatpush2.xpose.msra.mxu0 0.0
        %1279 = vmatprep.subr.mxu0 0.0
        %1280 = vmatpush2.xpose.msra.mxu0 0.0
        %1281 = vmatprep.subr.mxu0 0.0
        %1282 = vmatpush2.xpose.msra.mxu0 0.0
        %1283 = vmatprep.subr.mxu0 0.0
        %1284 = vmatpush2.xpose.msra.mxu0 0.0
        %1285 = vmatprep.subr.mxu0 0.0
        %1286 = vmatpush2.xpose.msra.mxu0 0.0
        %1287 = vmatprep.subr.mxu0 0.0
        %1288 = vmatpush2.xpose.msra.mxu0 0.0
        %1289 = vmatprep.subr.mxu0 0.0
        %1290 = vmatpush2.xpose.msra.mxu0 0.0
        %1291 = vmatprep.subr.mxu0 0.0
        %1292 = vmatpush2.xpose.msra.mxu0 0.0
        %1293 = vmatprep.subr.mxu0 0.0
        %1294 = vmatpush2.xpose.msra.mxu0 0.0
        %1295 = vmatprep.subr.mxu0 0.0
        %1296 = vmatpush2.xpose.msra.mxu0 0.0
        %1297 = vmatprep.subr.mxu0 0.0
        %1298 = vmatpush2.xpose.msra.mxu0 0.0
        %1299 = vmatprep.subr.mxu0 0.0
        %1300 = vmatpush2.xpose.msra.mxu0 0.0
        %1301 = vmatprep.subr.mxu0 0.0
        %1302 = vmatpush2.xpose.msra.mxu0 0.0
        %1303 = vmatprep.mubr.f32.mxu0 0.0
        %1304 = vmatmul.mubr.f32.gmra.mxu0 %v1225
        %v1305 = vpop.f32.mrf.mxu0
        %v1306 = vadd.f32 0.0, %v1305
        %v1307 = vpop.f32.mrf.mxu0
        %1308 = vdwg.mxu0
        %v1310 = vsel %vm737, %v1079, 0
        %v1313 = vsel %vm737, %v1180, 0
        %v1316 = vsel %vm737, %v1188, 0
        %v1319 = vsel %vm737, %v1196, 0
        %v1322 = vsel %vm737, %v1204, 0
        %1324 = vmatprep.subr.mxu0 0.0
        %1325 = vmatpush1.xpose.msra.mxu0 0.0
        %1326 = vmatprep.subr.mxu0 0.0
        %1327 = vmatpush1.xpose.msra.mxu0 0.0
        %1328 = vmatprep.subr.mxu0 0.0
        %1329 = vmatpush1.xpose.msra.mxu0 0.0
        %1330 = vmatprep.subr.mxu0 0.0
        %1331 = vmatpush1.xpose.msra.mxu0 0.0
        %1332 = vmatprep.subr.mxu0 0.0
        %1333 = vmatpush1.xpose.msra.mxu0 0.0
        %1334 = vmatprep.subr.mxu0 0.0
        %1335 = vmatpush1.xpose.msra.mxu0 0.0
        %1336 = vmatprep.subr.mxu0 0.0
        %1337 = vmatpush1.xpose.msra.mxu0 0.0
        %1338 = vmatprep.subr.mxu0 0.0
        %1339 = vmatpush1.xpose.msra.mxu0 0.0
        %1340 = vmatprep.subr.mxu0 0.0
        %1341 = vmatpush1.xpose.msra.mxu0 0.0
        %1342 = vmatprep.subr.mxu0 0.0
        %1343 = vmatpush1.xpose.msra.mxu0 0.0
        %1344 = vmatprep.subr.mxu0 0.0
        %1345 = vmatpush1.xpose.msra.mxu0 0.0
        %1346 = vmatprep.subr.mxu0 0.0
        %1347 = vmatpush1.xpose.msra.mxu0 0.0
        %1348 = vmatprep.subr.mxu0 0.0
        %1349 = vmatpush1.xpose.msra.mxu0 %v1322
        %1350 = vmatprep.subr.mxu0 0.0
        %1351 = vmatpush1.xpose.msra.mxu0 %v1319
        %1352 = vmatprep.subr.mxu0 0.0
        %1353 = vmatpush1.xpose.msra.mxu0 %v1316
        %1354 = vmatprep.subr.mxu0 0.0
        %1355 = vmatpush1.xpose.msra.mxu0 %v1313
        %1356 = vmatprep.subr.mxu0 0.0
        %1357 = vmatpush2.xpose.msra.mxu0 0.0
        %1358 = vmatprep.subr.mxu0 0.0
        %1359 = vmatpush2.xpose.msra.mxu0 0.0
        %1360 = vmatprep.subr.mxu0 0.0
        %1361 = vmatpush2.xpose.msra.mxu0 0.0
        %1362 = vmatprep.subr.mxu0 0.0
        %1363 = vmatpush2.xpose.msra.mxu0 0.0
        %1364 = vmatprep.subr.mxu0 0.0
        %1365 = vmatpush2.xpose.msra.mxu0 0.0
        %1366 = vmatprep.subr.mxu0 0.0
        %1367 = vmatpush2.xpose.msra.mxu0 0.0
        %1368 = vmatprep.subr.mxu0 0.0
        %1369 = vmatpush2.xpose.msra.mxu0 0.0
        %1370 = vmatprep.subr.mxu0 0.0
        %1371 = vmatpush2.xpose.msra.mxu0 0.0
        %1372 = vmatprep.subr.mxu0 0.0
        %1373 = vmatpush2.xpose.msra.mxu0 0.0
        %1374 = vmatprep.subr.mxu0 0.0
        %1375 = vmatpush2.xpose.msra.mxu0 0.0
        %1376 = vmatprep.subr.mxu0 0.0
        %1377 = vmatpush2.xpose.msra.mxu0 0.0
        %1378 = vmatprep.subr.mxu0 0.0
        %1379 = vmatpush2.xpose.msra.mxu0 0.0
        %1380 = vmatprep.subr.mxu0 0.0
        %1381 = vmatpush2.xpose.msra.mxu0 0.0
        %1382 = vmatprep.subr.mxu0 0.0
        %1383 = vmatpush2.xpose.msra.mxu0 0.0
        %1384 = vmatprep.subr.mxu0 0.0
        %1385 = vmatpush2.xpose.msra.mxu0 0.0
        %1386 = vmatprep.subr.mxu0 0.0
        %1387 = vmatpush2.xpose.msra.mxu0 0.0
        %1388 = vmatprep.mubr.f32.mxu0 0.0
        %1389 = vmatmul.mubr.f32.gmra.mxu0 %v1310
        %v1390 = vpop.f32.mrf.mxu0
        %v1391 = vadd.f32 0.0, %v1390
        %v1392 = vpop.f32.mrf.mxu0
        %1393 = vdwg.mxu0
        %v1395 = vsel %vm737, %v1080, 0
        %v1398 = vsel %vm737, %v1181, 0
        %v1401 = vsel %vm737, %v1189, 0
        %v1404 = vsel %vm737, %v1197, 0
        %v1407 = vsel %vm737, %v1205, 0
        %1409 = vmatprep.subr.mxu0 0.0
        %1410 = vmatpush1.xpose.msra.mxu0 0.0
        %1411 = vmatprep.subr.mxu0 0.0
        %1412 = vmatpush1.xpose.msra.mxu0 0.0
        %1413 = vmatprep.subr.mxu0 0.0
        %1414 = vmatpush1.xpose.msra.mxu0 0.0
        %1415 = vmatprep.subr.mxu0 0.0
        %1416 = vmatpush1.xpose.msra.mxu0 0.0
        %1417 = vmatprep.subr.mxu0 0.0
        %1418 = vmatpush1.xpose.msra.mxu0 0.0
        %1419 = vmatprep.subr.mxu0 0.0
        %1420 = vmatpush1.xpose.msra.mxu0 0.0
        %1421 = vmatprep.subr.mxu0 0.0
        %1422 = vmatpush1.xpose.msra.mxu0 0.0
        %1423 = vmatprep.subr.mxu0 0.0
        %1424 = vmatpush1.xpose.msra.mxu0 0.0
        %1425 = vmatprep.subr.mxu0 0.0
        %1426 = vmatpush1.xpose.msra.mxu0 0.0
        %1427 = vmatprep.subr.mxu0 0.0
        %1428 = vmatpush1.xpose.msra.mxu0 0.0
        %1429 = vmatprep.subr.mxu0 0.0
        %1430 = vmatpush1.xpose.msra.mxu0 0.0
        %1431 = vmatprep.subr.mxu0 0.0
        %1432 = vmatpush1.xpose.msra.mxu0 0.0
        %1433 = vmatprep.subr.mxu0 0.0
        %1434 = vmatpush1.xpose.msra.mxu0 %v1407
        %1435 = vmatprep.subr.mxu0 0.0
        %1436 = vmatpush1.xpose.msra.mxu0 %v1404
        %1437 = vmatprep.subr.mxu0 0.0
        %1438 = vmatpush1.xpose.msra.mxu0 %v1401
        %1439 = vmatprep.subr.mxu0 0.0
        %1440 = vmatpush1.xpose.msra.mxu0 %v1398
        %1441 = vmatprep.subr.mxu0 0.0
        %1442 = vmatpush2.xpose.msra.mxu0 0.0
        %1443 = vmatprep.subr.mxu0 0.0
        %1444 = vmatpush2.xpose.msra.mxu0 0.0
        %1445 = vmatprep.subr.mxu0 0.0
        %1446 = vmatpush2.xpose.msra.mxu0 0.0
        %1447 = vmatprep.subr.mxu0 0.0
        %1448 = vmatpush2.xpose.msra.mxu0 0.0
        %1449 = vmatprep.subr.mxu0 0.0
        %1450 = vmatpush2.xpose.msra.mxu0 0.0
        %1451 = vmatprep.subr.mxu0 0.0
        %1452 = vmatpush2.xpose.msra.mxu0 0.0
        %1453 = vmatprep.subr.mxu0 0.0
        %1454 = vmatpush2.xpose.msra.mxu0 0.0
        %1455 = vmatprep.subr.mxu0 0.0
        %1456 = vmatpush2.xpose.msra.mxu0 0.0
        %1457 = vmatprep.subr.mxu0 0.0
        %1458 = vmatpush2.xpose.msra.mxu0 0.0
        %1459 = vmatprep.subr.mxu0 0.0
        %1460 = vmatpush2.xpose.msra.mxu0 0.0
        %1461 = vmatprep.subr.mxu0 0.0
        %1462 = vmatpush2.xpose.msra.mxu0 0.0
        %1463 = vmatprep.subr.mxu0 0.0
        %1464 = vmatpush2.xpose.msra.mxu0 0.0
        %1465 = vmatprep.subr.mxu0 0.0
        %1466 = vmatpush2.xpose.msra.mxu0 0.0
        %1467 = vmatprep.subr.mxu0 0.0
        %1468 = vmatpush2.xpose.msra.mxu0 0.0
        %1469 = vmatprep.subr.mxu0 0.0
        %1470 = vmatpush2.xpose.msra.mxu0 0.0
        %1471 = vmatprep.subr.mxu0 0.0
        %1472 = vmatpush2.xpose.msra.mxu0 0.0
        %1473 = vmatprep.mubr.f32.mxu0 0.0
        %1474 = vmatmul.mubr.f32.gmra.mxu0 %v1395
        %v1475 = vpop.f32.mrf.mxu0
        %v1476 = vadd.f32 0.0, %v1475
        %v1477 = vpop.f32.mrf.mxu0
        %1478 = vdwg.mxu0
        %v1480 = vsel %vm737, %v1081, 0
        %v1483 = vsel %vm737, %v1182, 0
        %v1486 = vsel %vm737, %v1190, 0
        %v1489 = vsel %vm737, %v1198, 0
        %v1492 = vsel %vm737, %v1206, 0
        %1494 = vmatprep.subr.mxu0 0.0
        %1495 = vmatpush1.xpose.msra.mxu0 0.0
        %1496 = vmatprep.subr.mxu0 0.0
        %1497 = vmatpush1.xpose.msra.mxu0 0.0
        %1498 = vmatprep.subr.mxu0 0.0
        %1499 = vmatpush1.xpose.msra.mxu0 0.0
        %1500 = vmatprep.subr.mxu0 0.0
        %1501 = vmatpush1.xpose.msra.mxu0 0.0
        %1502 = vmatprep.subr.mxu0 0.0
        %1503 = vmatpush1.xpose.msra.mxu0 0.0
        %1504 = vmatprep.subr.mxu0 0.0
        %1505 = vmatpush1.xpose.msra.mxu0 0.0
        %1506 = vmatprep.subr.mxu0 0.0
        %1507 = vmatpush1.xpose.msra.mxu0 0.0
        %1508 = vmatprep.subr.mxu0 0.0
        %1509 = vmatpush1.xpose.msra.mxu0 0.0
        %1510 = vmatprep.subr.mxu0 0.0
        %1511 = vmatpush1.xpose.msra.mxu0 0.0
        %1512 = vmatprep.subr.mxu0 0.0
        %1513 = vmatpush1.xpose.msra.mxu0 0.0
        %1514 = vmatprep.subr.mxu0 0.0
        %1515 = vmatpush1.xpose.msra.mxu0 0.0
        %1516 = vmatprep.subr.mxu0 0.0
        %1517 = vmatpush1.xpose.msra.mxu0 0.0
        %1518 = vmatprep.subr.mxu0 0.0
        %1519 = vmatpush1.xpose.msra.mxu0 %v1492
        %1520 = vmatprep.subr.mxu0 0.0
        %1521 = vmatpush1.xpose.msra.mxu0 %v1489
        %1522 = vmatprep.subr.mxu0 0.0
        %1523 = vmatpush1.xpose.msra.mxu0 %v1486
        %1524 = vmatprep.subr.mxu0 0.0
        %1525 = vmatpush1.xpose.msra.mxu0 %v1483
        %1526 = vmatprep.subr.mxu0 0.0
        %1527 = vmatpush2.xpose.msra.mxu0 0.0
        %1528 = vmatprep.subr.mxu0 0.0
        %1529 = vmatpush2.xpose.msra.mxu0 0.0
        %1530 = vmatprep.subr.mxu0 0.0
        %1531 = vmatpush2.xpose.msra.mxu0 0.0
        %1532 = vmatprep.subr.mxu0 0.0
        %1533 = vmatpush2.xpose.msra.mxu0 0.0
        %1534 = vmatprep.subr.mxu0 0.0
        %1535 = vmatpush2.xpose.msra.mxu0 0.0
        %1536 = vmatprep.subr.mxu0 0.0
        %1537 = vmatpush2.xpose.msra.mxu0 0.0
        %1538 = vmatprep.subr.mxu0 0.0
        %1539 = vmatpush2.xpose.msra.mxu0 0.0
        %1540 = vmatprep.subr.mxu0 0.0
        %1541 = vmatpush2.xpose.msra.mxu0 0.0
        %1542 = vmatprep.subr.mxu0 0.0
        %1543 = vmatpush2.xpose.msra.mxu0 0.0
        %1544 = vmatprep.subr.mxu0 0.0
        %1545 = vmatpush2.xpose.msra.mxu0 0.0
        %1546 = vmatprep.subr.mxu0 0.0
        %1547 = vmatpush2.xpose.msra.mxu0 0.0
        %1548 = vmatprep.subr.mxu0 0.0
        %1549 = vmatpush2.xpose.msra.mxu0 0.0
        %1550 = vmatprep.subr.mxu0 0.0
        %1551 = vmatpush2.xpose.msra.mxu0 0.0
        %1552 = vmatprep.subr.mxu0 0.0
        %1553 = vmatpush2.xpose.msra.mxu0 0.0
        %1554 = vmatprep.subr.mxu0 0.0
        %1555 = vmatpush2.xpose.msra.mxu0 0.0
        %1556 = vmatprep.subr.mxu0 0.0
        %1557 = vmatpush2.xpose.msra.mxu0 0.0
        %1558 = vmatprep.mubr.f32.mxu0 0.0
        %1559 = vmatmul.mubr.f32.gmra.mxu0 %v1480
        %v1560 = vpop.f32.mrf.mxu0
        %v1561 = vadd.f32 0.0, %v1560
        %v1562 = vpop.f32.mrf.mxu0
        %1563 = vdwg.mxu0
        %v1564 = vmul.f32 %v1306, %v1223
        %v1565 = vmul.f32 %v1391, %v1223
        %v1566 = vmul.f32 %v1476, %v1223
        %v1567 = vmul.f32 %v1561, %v1223
        %v1569 = vsel %vm737, %v1564, 0
        %1571 = vmatprep.subr.mxu0 0.0
        %1572 = vmatpush1.msra.mxu0 0.0
        %1573 = vmatprep.subr.mxu0 0.0
        %1574 = vmatpush1.msra.mxu0 0.0
        %1575 = vmatprep.subr.mxu0 0.0
        %1576 = vmatpush1.msra.mxu0 0.0
        %1577 = vmatprep.subr.mxu0 0.0
        %1578 = vmatpush1.msra.mxu0 0.0
        %1579 = vmatprep.subr.mxu0 0.0
        %1580 = vmatpush1.msra.mxu0 0.0
        %1581 = vmatprep.subr.mxu0 0.0
        %1582 = vmatpush1.msra.mxu0 0.0
        %1583 = vmatprep.subr.mxu0 0.0
        %1584 = vmatpush1.msra.mxu0 0.0
        %1585 = vmatprep.subr.mxu0 0.0
        %1586 = vmatpush1.msra.mxu0 0.0
        %1587 = vmatprep.subr.mxu0 0.0
        %1588 = vmatpush1.msra.mxu0 0.0
        %1589 = vmatprep.subr.mxu0 0.0
        %1590 = vmatpush1.msra.mxu0 0.0
        %1591 = vmatprep.subr.mxu0 0.0
        %1592 = vmatpush1.msra.mxu0 0.0
        %1593 = vmatprep.subr.mxu0 0.0
        %1594 = vmatpush1.msra.mxu0 0.0
        %1595 = vmatprep.subr.mxu0 0.0
        %1596 = vmatpush1.msra.mxu0 %v1219
        %1597 = vmatprep.subr.mxu0 0.0
        %1598 = vmatpush1.msra.mxu0 %v1215
        %1599 = vmatprep.subr.mxu0 0.0
        %1600 = vmatpush1.msra.mxu0 %v1211
        %1601 = vmatprep.subr.mxu0 0.0
        %1602 = vmatpush1.msra.mxu0 %v1207
        %1603 = vmatprep.subr.mxu0 0.0
        %1604 = vmatpush2.msra.mxu0 0.0
        %1605 = vmatprep.subr.mxu0 0.0
        %1606 = vmatpush2.msra.mxu0 0.0
        %1607 = vmatprep.subr.mxu0 0.0
        %1608 = vmatpush2.msra.mxu0 0.0
        %1609 = vmatprep.subr.mxu0 0.0
        %1610 = vmatpush2.msra.mxu0 0.0
        %1611 = vmatprep.subr.mxu0 0.0
        %1612 = vmatpush2.msra.mxu0 0.0
        %1613 = vmatprep.subr.mxu0 0.0
        %1614 = vmatpush2.msra.mxu0 0.0
        %1615 = vmatprep.subr.mxu0 0.0
        %1616 = vmatpush2.msra.mxu0 0.0
        %1617 = vmatprep.subr.mxu0 0.0
        %1618 = vmatpush2.msra.mxu0 0.0
        %1619 = vmatprep.subr.mxu0 0.0
        %1620 = vmatpush2.msra.mxu0 0.0
        %1621 = vmatprep.subr.mxu0 0.0
        %1622 = vmatpush2.msra.mxu0 0.0
        %1623 = vmatprep.subr.mxu0 0.0
        %1624 = vmatpush2.msra.mxu0 0.0
        %1625 = vmatprep.subr.mxu0 0.0
        %1626 = vmatpush2.msra.mxu0 0.0
        %1627 = vmatprep.subr.mxu0 0.0
        %1628 = vmatpush2.msra.mxu0 0.0
        %1629 = vmatprep.subr.mxu0 0.0
        %1630 = vmatpush2.msra.mxu0 0.0
        %1631 = vmatprep.subr.mxu0 0.0
        %1632 = vmatpush2.msra.mxu0 0.0
        %1633 = vmatprep.subr.mxu0 0.0
        %1634 = vmatpush2.msra.mxu0 0.0
        %1635 = vmatprep.mubr.f32.mxu0 0.0
        %1636 = vmatmul.mubr.f32.gmra.mxu0 %v1569
        %v1637 = vpop.f32.mrf.mxu0
        %v1638 = vadd.f32 0.0, %v1637
        %v1639 = vpop.f32.mrf.mxu0
        %1640 = vdwg.mxu0
        %v1642 = vsel %vm737, %v1565, 0
        %1644 = vmatprep.subr.mxu0 0.0
        %1645 = vmatpush1.msra.mxu0 0.0
        %1646 = vmatprep.subr.mxu0 0.0
        %1647 = vmatpush1.msra.mxu0 0.0
        %1648 = vmatprep.subr.mxu0 0.0
        %1649 = vmatpush1.msra.mxu0 0.0
        %1650 = vmatprep.subr.mxu0 0.0
        %1651 = vmatpush1.msra.mxu0 0.0
        %1652 = vmatprep.subr.mxu0 0.0
        %1653 = vmatpush1.msra.mxu0 0.0
        %1654 = vmatprep.subr.mxu0 0.0
        %1655 = vmatpush1.msra.mxu0 0.0
        %1656 = vmatprep.subr.mxu0 0.0
        %1657 = vmatpush1.msra.mxu0 0.0
        %1658 = vmatprep.subr.mxu0 0.0
        %1659 = vmatpush1.msra.mxu0 0.0
        %1660 = vmatprep.subr.mxu0 0.0
        %1661 = vmatpush1.msra.mxu0 0.0
        %1662 = vmatprep.subr.mxu0 0.0
        %1663 = vmatpush1.msra.mxu0 0.0
        %1664 = vmatprep.subr.mxu0 0.0
        %1665 = vmatpush1.msra.mxu0 0.0
        %1666 = vmatprep.subr.mxu0 0.0
        %1667 = vmatpush1.msra.mxu0 0.0
        %1668 = vmatprep.subr.mxu0 0.0
        %1669 = vmatpush1.msra.mxu0 %v1220
        %1670 = vmatprep.subr.mxu0 0.0
        %1671 = vmatpush1.msra.mxu0 %v1216
        %1672 = vmatprep.subr.mxu0 0.0
        %1673 = vmatpush1.msra.mxu0 %v1212
        %1674 = vmatprep.subr.mxu0 0.0
        %1675 = vmatpush1.msra.mxu0 %v1208
        %1676 = vmatprep.subr.mxu0 0.0
        %1677 = vmatpush2.msra.mxu0 0.0
        %1678 = vmatprep.subr.mxu0 0.0
        %1679 = vmatpush2.msra.mxu0 0.0
        %1680 = vmatprep.subr.mxu0 0.0
        %1681 = vmatpush2.msra.mxu0 0.0
        %1682 = vmatprep.subr.mxu0 0.0
        %1683 = vmatpush2.msra.mxu0 0.0
        %1684 = vmatprep.subr.mxu0 0.0
        %1685 = vmatpush2.msra.mxu0 0.0
        %1686 = vmatprep.subr.mxu0 0.0
        %1687 = vmatpush2.msra.mxu0 0.0
        %1688 = vmatprep.subr.mxu0 0.0
        %1689 = vmatpush2.msra.mxu0 0.0
        %1690 = vmatprep.subr.mxu0 0.0
        %1691 = vmatpush2.msra.mxu0 0.0
        %1692 = vmatprep.subr.mxu0 0.0
        %1693 = vmatpush2.msra.mxu0 0.0
        %1694 = vmatprep.subr.mxu0 0.0
        %1695 = vmatpush2.msra.mxu0 0.0
        %1696 = vmatprep.subr.mxu0 0.0
        %1697 = vmatpush2.msra.mxu0 0.0
        %1698 = vmatprep.subr.mxu0 0.0
        %1699 = vmatpush2.msra.mxu0 0.0
        %1700 = vmatprep.subr.mxu0 0.0
        %1701 = vmatpush2.msra.mxu0 0.0
        %1702 = vmatprep.subr.mxu0 0.0
        %1703 = vmatpush2.msra.mxu0 0.0
        %1704 = vmatprep.subr.mxu0 0.0
        %1705 = vmatpush2.msra.mxu0 0.0
        %1706 = vmatprep.subr.mxu0 0.0
        %1707 = vmatpush2.msra.mxu0 0.0
        %1708 = vmatprep.mubr.f32.mxu0 0.0
        %1709 = vmatmul.mubr.f32.gmra.mxu0 %v1642
        %v1710 = vpop.f32.mrf.mxu0
        %v1711 = vadd.f32 0.0, %v1710
        %v1712 = vpop.f32.mrf.mxu0
        %1713 = vdwg.mxu0
        %v1715 = vsel %vm737, %v1566, 0
        %1717 = vmatprep.subr.mxu0 0.0
        %1718 = vmatpush1.msra.mxu0 0.0
        %1719 = vmatprep.subr.mxu0 0.0
        %1720 = vmatpush1.msra.mxu0 0.0
        %1721 = vmatprep.subr.mxu0 0.0
        %1722 = vmatpush1.msra.mxu0 0.0
        %1723 = vmatprep.subr.mxu0 0.0
        %1724 = vmatpush1.msra.mxu0 0.0
        %1725 = vmatprep.subr.mxu0 0.0
        %1726 = vmatpush1.msra.mxu0 0.0
        %1727 = vmatprep.subr.mxu0 0.0
        %1728 = vmatpush1.msra.mxu0 0.0
        %1729 = vmatprep.subr.mxu0 0.0
        %1730 = vmatpush1.msra.mxu0 0.0
        %1731 = vmatprep.subr.mxu0 0.0
        %1732 = vmatpush1.msra.mxu0 0.0
        %1733 = vmatprep.subr.mxu0 0.0
        %1734 = vmatpush1.msra.mxu0 0.0
        %1735 = vmatprep.subr.mxu0 0.0
        %1736 = vmatpush1.msra.mxu0 0.0
        %1737 = vmatprep.subr.mxu0 0.0
        %1738 = vmatpush1.msra.mxu0 0.0
        %1739 = vmatprep.subr.mxu0 0.0
        %1740 = vmatpush1.msra.mxu0 0.0
        %1741 = vmatprep.subr.mxu0 0.0
        %1742 = vmatpush1.msra.mxu0 %v1221
        %1743 = vmatprep.subr.mxu0 0.0
        %1744 = vmatpush1.msra.mxu0 %v1217
        %1745 = vmatprep.subr.mxu0 0.0
        %1746 = vmatpush1.msra.mxu0 %v1213
        %1747 = vmatprep.subr.mxu0 0.0
        %1748 = vmatpush1.msra.mxu0 %v1209
        %1749 = vmatprep.subr.mxu0 0.0
        %1750 = vmatpush2.msra.mxu0 0.0
        %1751 = vmatprep.subr.mxu0 0.0
        %1752 = vmatpush2.msra.mxu0 0.0
        %1753 = vmatprep.subr.mxu0 0.0
        %1754 = vmatpush2.msra.mxu0 0.0
        %1755 = vmatprep.subr.mxu0 0.0
        %1756 = vmatpush2.msra.mxu0 0.0
        %1757 = vmatprep.subr.mxu0 0.0
        %1758 = vmatpush2.msra.mxu0 0.0
        %1759 = vmatprep.subr.mxu0 0.0
        %1760 = vmatpush2.msra.mxu0 0.0
        %1761 = vmatprep.subr.mxu0 0.0
        %1762 = vmatpush2.msra.mxu0 0.0
        %1763 = vmatprep.subr.mxu0 0.0
        %1764 = vmatpush2.msra.mxu0 0.0
        %1765 = vmatprep.subr.mxu0 0.0
        %1766 = vmatpush2.msra.mxu0 0.0
        %1767 = vmatprep.subr.mxu0 0.0
        %1768 = vmatpush2.msra.mxu0 0.0
        %1769 = vmatprep.subr.mxu0 0.0
        %1770 = vmatpush2.msra.mxu0 0.0
        %1771 = vmatprep.subr.mxu0 0.0
        %1772 = vmatpush2.msra.mxu0 0.0
        %1773 = vmatprep.subr.mxu0 0.0
        %1774 = vmatpush2.msra.mxu0 0.0
        %1775 = vmatprep.subr.mxu0 0.0
        %1776 = vmatpush2.msra.mxu0 0.0
        %1777 = vmatprep.subr.mxu0 0.0
        %1778 = vmatpush2.msra.mxu0 0.0
        %1779 = vmatprep.subr.mxu0 0.0
        %1780 = vmatpush2.msra.mxu0 0.0
        %1781 = vmatprep.mubr.f32.mxu0 0.0
        %1782 = vmatmul.mubr.f32.gmra.mxu0 %v1715
        %v1783 = vpop.f32.mrf.mxu0
        %v1784 = vadd.f32 0.0, %v1783
        %v1785 = vpop.f32.mrf.mxu0
        %1786 = vdwg.mxu0
        %v1788 = vsel %vm737, %v1567, 0
        %1790 = vmatprep.subr.mxu0 0.0
        %1791 = vmatpush1.msra.mxu0 0.0
        %1792 = vmatprep.subr.mxu0 0.0
        %1793 = vmatpush1.msra.mxu0 0.0
        %1794 = vmatprep.subr.mxu0 0.0
        %1795 = vmatpush1.msra.mxu0 0.0
        %1796 = vmatprep.subr.mxu0 0.0
        %1797 = vmatpush1.msra.mxu0 0.0
        %1798 = vmatprep.subr.mxu0 0.0
        %1799 = vmatpush1.msra.mxu0 0.0
        %1800 = vmatprep.subr.mxu0 0.0
        %1801 = vmatpush1.msra.mxu0 0.0
        %1802 = vmatprep.subr.mxu0 0.0
        %1803 = vmatpush1.msra.mxu0 0.0
        %1804 = vmatprep.subr.mxu0 0.0
        %1805 = vmatpush1.msra.mxu0 0.0
        %1806 = vmatprep.subr.mxu0 0.0
        %1807 = vmatpush1.msra.mxu0 0.0
        %1808 = vmatprep.subr.mxu0 0.0
        %1809 = vmatpush1.msra.mxu0 0.0
        %1810 = vmatprep.subr.mxu0 0.0
        %1811 = vmatpush1.msra.mxu0 0.0
        %1812 = vmatprep.subr.mxu0 0.0
        %1813 = vmatpush1.msra.mxu0 0.0
        %1814 = vmatprep.subr.mxu0 0.0
        %1815 = vmatpush1.msra.mxu0 %v1222
        %1816 = vmatprep.subr.mxu0 0.0
        %1817 = vmatpush1.msra.mxu0 %v1218
        %1818 = vmatprep.subr.mxu0 0.0
        %1819 = vmatpush1.msra.mxu0 %v1214
        %1820 = vmatprep.subr.mxu0 0.0
        %1821 = vmatpush1.msra.mxu0 %v1210
        %1822 = vmatprep.subr.mxu0 0.0
        %1823 = vmatpush2.msra.mxu0 0.0
        %1824 = vmatprep.subr.mxu0 0.0
        %1825 = vmatpush2.msra.mxu0 0.0
        %1826 = vmatprep.subr.mxu0 0.0
        %1827 = vmatpush2.msra.mxu0 0.0
        %1828 = vmatprep.subr.mxu0 0.0
        %1829 = vmatpush2.msra.mxu0 0.0
        %1830 = vmatprep.subr.mxu0 0.0
        %1831 = vmatpush2.msra.mxu0 0.0
        %1832 = vmatprep.subr.mxu0 0.0
        %1833 = vmatpush2.msra.mxu0 0.0
        %1834 = vmatprep.subr.mxu0 0.0
        %1835 = vmatpush2.msra.mxu0 0.0
        %1836 = vmatprep.subr.mxu0 0.0
        %1837 = vmatpush2.msra.mxu0 0.0
        %1838 = vmatprep.subr.mxu0 0.0
        %1839 = vmatpush2.msra.mxu0 0.0
        %1840 = vmatprep.subr.mxu0 0.0
        %1841 = vmatpush2.msra.mxu0 0.0
        %1842 = vmatprep.subr.mxu0 0.0
        %1843 = vmatpush2.msra.mxu0 0.0
        %1844 = vmatprep.subr.mxu0 0.0
        %1845 = vmatpush2.msra.mxu0 0.0
        %1846 = vmatprep.subr.mxu0 0.0
        %1847 = vmatpush2.msra.mxu0 0.0
        %1848 = vmatprep.subr.mxu0 0.0
        %1849 = vmatpush2.msra.mxu0 0.0
        %1850 = vmatprep.subr.mxu0 0.0
        %1851 = vmatpush2.msra.mxu0 0.0
        %1852 = vmatprep.subr.mxu0 0.0
        %1853 = vmatpush2.msra.mxu0 0.0
        %1854 = vmatprep.mubr.f32.mxu0 0.0
        %1855 = vmatmul.mubr.f32.gmra.mxu0 %v1788
        %v1856 = vpop.f32.mrf.mxu0
        %v1857 = vadd.f32 0.0, %v1856
        %v1858 = vpop.f32.mrf.mxu0
        %1859 = vdwg.mxu0
        %v1860 = vld [vmem:[%s13] sm:$0xff]
        %v1861 = vld [vmem:[%s13 + $0x8] sm:$0xff]
        %v1862 = vld [vmem:[%s13 + $0x10] sm:$0xff]
        %v1863 = vld [vmem:[%s13 + $0x18] sm:$0xff]
        %v1865 = vsel %vm737, %v1638, 0
        %v1868 = vsel %vm737, %v1711, 0
        %v1871 = vsel %vm737, %v1784, 0
        %v1874 = vsel %vm737, %v1857, 0
        %1876 = vmatprep.subr.mxu0 0.0
        %1877 = vmatpush1.msra.mxu0 0.0
        %1878 = vmatprep.subr.mxu0 0.0
        %1879 = vmatpush1.msra.mxu0 0.0
        %1880 = vmatprep.subr.mxu0 0.0
        %1881 = vmatpush1.msra.mxu0 0.0
        %1882 = vmatprep.subr.mxu0 0.0
        %1883 = vmatpush1.msra.mxu0 0.0
        %1884 = vmatprep.subr.mxu0 0.0
        %1885 = vmatpush1.msra.mxu0 0.0
        %1886 = vmatprep.subr.mxu0 0.0
        %1887 = vmatpush1.msra.mxu0 0.0
        %1888 = vmatprep.subr.mxu0 0.0
        %1889 = vmatpush1.msra.mxu0 0.0
        %1890 = vmatprep.subr.mxu0 0.0
        %1891 = vmatpush1.msra.mxu0 0.0
        %1892 = vmatprep.subr.mxu0 0.0
        %1893 = vmatpush1.msra.mxu0 0.0
        %1894 = vmatprep.subr.mxu0 0.0
        %1895 = vmatpush1.msra.mxu0 0.0
        %1896 = vmatprep.subr.mxu0 0.0
        %1897 = vmatpush1.msra.mxu0 0.0
        %1898 = vmatprep.subr.mxu0 0.0
        %1899 = vmatpush1.msra.mxu0 0.0
        %1900 = vmatprep.subr.mxu0 0.0
        %1901 = vmatpush1.msra.mxu0 %v1863
        %1902 = vmatprep.subr.mxu0 0.0
        %1903 = vmatpush1.msra.mxu0 %v1862
        %1904 = vmatprep.subr.mxu0 0.0
        %1905 = vmatpush1.msra.mxu0 %v1861
        %1906 = vmatprep.subr.mxu0 0.0
        %1907 = vmatpush1.msra.mxu0 %v1860
        %1908 = vmatprep.subr.mxu0 0.0
        %1909 = vmatpush2.msra.mxu0 0.0
        %1910 = vmatprep.subr.mxu0 0.0
        %1911 = vmatpush2.msra.mxu0 0.0
        %1912 = vmatprep.subr.mxu0 0.0
        %1913 = vmatpush2.msra.mxu0 0.0
        %1914 = vmatprep.subr.mxu0 0.0
        %1915 = vmatpush2.msra.mxu0 0.0
        %1916 = vmatprep.subr.mxu0 0.0
        %1917 = vmatpush2.msra.mxu0 0.0
        %1918 = vmatprep.subr.mxu0 0.0
        %1919 = vmatpush2.msra.mxu0 0.0
        %1920 = vmatprep.subr.mxu0 0.0
        %1921 = vmatpush2.msra.mxu0 0.0
        %1922 = vmatprep.subr.mxu0 0.0
        %1923 = vmatpush2.msra.mxu0 0.0
        %1924 = vmatprep.subr.mxu0 0.0
        %1925 = vmatpush2.msra.mxu0 0.0
        %1926 = vmatprep.subr.mxu0 0.0
        %1927 = vmatpush2.msra.mxu0 0.0
        %1928 = vmatprep.subr.mxu0 0.0
        %1929 = vmatpush2.msra.mxu0 0.0
        %1930 = vmatprep.subr.mxu0 0.0
        %1931 = vmatpush2.msra.mxu0 0.0
        %1932 = vmatprep.subr.mxu0 0.0
        %1933 = vmatpush2.msra.mxu0 0.0
        %1934 = vmatprep.subr.mxu0 0.0
        %1935 = vmatpush2.msra.mxu0 0.0
        %1936 = vmatprep.subr.mxu0 0.0
        %1937 = vmatpush2.msra.mxu0 0.0
        %1938 = vmatprep.subr.mxu0 0.0
        %1939 = vmatpush2.msra.mxu0 0.0
        %1940 = vmatprep.mubr.f32.mxu0 0.0
        %1941 = vmatmul.mubr.f32.gmra.mxu0 %v1865
        %v1942 = vpop.f32.mrf.mxu0
        %v1943 = vadd.f32 0.0, %v1942
        %v1944 = vpop.f32.mrf.mxu0
        %1945 = vmatprep.mubr.f32.mxu0 0.0
        %1946 = vmatmul.mubr.f32.gmra.mxu0 %v1868
        %v1947 = vpop.f32.mrf.mxu0
        %v1948 = vadd.f32 0.0, %v1947
        %v1949 = vpop.f32.mrf.mxu0
        %1950 = vmatprep.mubr.f32.mxu0 0.0
        %1951 = vmatmul.mubr.f32.gmra.mxu0 %v1871
        %v1952 = vpop.f32.mrf.mxu0
        %v1953 = vadd.f32 0.0, %v1952
        %v1954 = vpop.f32.mrf.mxu0
        %1955 = vmatprep.mubr.f32.mxu0 0.0
        %1956 = vmatmul.mubr.f32.gmra.mxu0 %v1874
        %v1957 = vpop.f32.mrf.mxu0
        %v1958 = vadd.f32 0.0, %v1957
        %v1959 = vpop.f32.mrf.mxu0
        %1960 = vdwg.mxu0
        %vm1961 = vcmask 31744
        %v1963 = vsel %vm1961, %v1943, 0
        %v1966 = vsel %vm1961, %v1948, 0
        %v1969 = vsel %vm1961, %v1953, 0
        %v1972 = vsel %vm1961, %v1958, 0
        %vm1974 = vcmask 1043456
        %v1976 = vsel %vm1974, %v1174, 0
        %1978 = vmatprep.subr.mxu0 0.0
        %1979 = vmatpush1.msra.mxu0 0.0
        %1980 = vmatprep.subr.mxu0 0.0
        %1981 = vmatpush1.msra.mxu0 0.0
        %1982 = vmatprep.subr.mxu0 0.0
        %1983 = vmatpush1.msra.mxu0 0.0
        %1984 = vmatprep.subr.mxu0 0.0
        %1985 = vmatpush1.msra.mxu0 0.0
        %1986 = vmatprep.subr.mxu0 0.0
        %1987 = vmatpush1.msra.mxu0 0.0
        %1988 = vmatprep.subr.mxu0 0.0
        %1989 = vmatpush1.msra.mxu0 0.0
        %1990 = vmatprep.subr.mxu0 0.0
        %1991 = vmatpush1.msra.mxu0 0.0
        %1992 = vmatprep.subr.mxu0 0.0
        %1993 = vmatpush1.msra.mxu0 0.0
        %1994 = vmatprep.subr.mxu0 0.0
        %1995 = vmatpush1.msra.mxu0 0.0
        %1996 = vmatprep.subr.mxu0 0.0
        %1997 = vmatpush1.msra.mxu0 0.0
        %1998 = vmatprep.subr.mxu0 0.0
        %1999 = vmatpush1.msra.mxu0 0.0
        %2000 = vmatprep.subr.mxu0 0.0
        %2001 = vmatpush1.msra.mxu0 0.0
        %2002 = vmatprep.subr.mxu0 0.0
        %2003 = vmatpush1.msra.mxu0 0.0
        %2004 = vmatprep.subr.mxu0 0.0
        %2005 = vmatpush1.msra.mxu0 0.0
        %2006 = vmatprep.subr.mxu0 0.0
        %2007 = vmatpush1.msra.mxu0 0.0
        %2008 = vmatprep.subr.mxu0 0.0
        %2009 = vmatpush1.msra.mxu0 %v1976
        %2010 = vmatprep.subr.mxu0 0.0
        %2011 = vmatpush2.msra.mxu0 0.0
        %2012 = vmatprep.subr.mxu0 0.0
        %2013 = vmatpush2.msra.mxu0 0.0
        %2014 = vmatprep.subr.mxu0 0.0
        %2015 = vmatpush2.msra.mxu0 0.0
        %2016 = vmatprep.subr.mxu0 0.0
        %2017 = vmatpush2.msra.mxu0 0.0
        %2018 = vmatprep.subr.mxu0 0.0
        %2019 = vmatpush2.msra.mxu0 0.0
        %2020 = vmatprep.subr.mxu0 0.0
        %2021 = vmatpush2.msra.mxu0 0.0
        %2022 = vmatprep.subr.mxu0 0.0
        %2023 = vmatpush2.msra.mxu0 0.0
        %2024 = vmatprep.subr.mxu0 0.0
        %2025 = vmatpush2.msra.mxu0 0.0
        %2026 = vmatprep.subr.mxu0 0.0
        %2027 = vmatpush2.msra.mxu0 0.0
        %2028 = vmatprep.subr.mxu0 0.0
        %2029 = vmatpush2.msra.mxu0 0.0
        %2030 = vmatprep.subr.mxu0 0.0
        %2031 = vmatpush2.msra.mxu0 0.0
        %2032 = vmatprep.subr.mxu0 0.0
        %2033 = vmatpush2.msra.mxu0 0.0
        %2034 = vmatprep.subr.mxu0 0.0
        %2035 = vmatpush2.msra.mxu0 0.0
        %2036 = vmatprep.subr.mxu0 0.0
        %2037 = vmatpush2.msra.mxu0 0.0
        %2038 = vmatprep.subr.mxu0 0.0
        %2039 = vmatpush2.msra.mxu0 0.0
        %2040 = vmatprep.subr.mxu0 0.0
        %2041 = vmatpush2.msra.mxu0 0.0
        %2042 = vmatprep.mubr.f32.mxu0 0.0
        %2043 = vmatmul.mubr.f32.gmra.mxu0 %v1963
        %v2044 = vpop.f32.mrf.mxu0
        %v2045 = vadd.f32 0.0, %v2044
        %v2046 = vpop.f32.mrf.mxu0
        %2047 = vmatprep.mubr.f32.mxu0 0.0
        %2048 = vmatmul.mubr.f32.gmra.mxu0 %v1966
        %v2049 = vpop.f32.mrf.mxu0
        %v2050 = vadd.f32 0.0, %v2049
        %v2051 = vpop.f32.mrf.mxu0
        %2052 = vmatprep.mubr.f32.mxu0 0.0
        %2053 = vmatmul.mubr.f32.gmra.mxu0 %v1969
        %v2054 = vpop.f32.mrf.mxu0
        %v2055 = vadd.f32 0.0, %v2054
        %v2056 = vpop.f32.mrf.mxu0
        %2057 = vmatprep.mubr.f32.mxu0 0.0
        %2058 = vmatmul.mubr.f32.gmra.mxu0 %v1972
        %v2059 = vpop.f32.mrf.mxu0
        %v2060 = vadd.f32 0.0, %v2059
        %v2061 = vpop.f32.mrf.mxu0
        %2062 = vdwg.mxu0
        %v2063 = vsub.f32 %v1638, %v2045
        %v2064 = vsub.f32 %v1711, %v2050
        %v2065 = vsub.f32 %v1784, %v2055
        %v2066 = vsub.f32 %v1857, %v2060
        %v2067 = vmul.f32 %v2063, %v2063
        %v2068 = vmul.f32 %v2064, %v2064
        %v2069 = vmul.f32 %v2065, %v2065
        %v2070 = vmul.f32 %v2066, %v2066
        %v2072 = vsel %vm737, %v2067, 0
        %v2075 = vsel %vm737, %v2068, 0
        %v2078 = vsel %vm737, %v2069, 0
        %v2081 = vsel %vm737, %v2070, 0
        %2083 = vmatprep.subr.mxu0 0.0
        %2084 = vmatpush1.msra.mxu0 0.0
        %2085 = vmatprep.subr.mxu0 0.0
        %2086 = vmatpush1.msra.mxu0 0.0
        %2087 = vmatprep.subr.mxu0 0.0
        %2088 = vmatpush1.msra.mxu0 0.0
        %2089 = vmatprep.subr.mxu0 0.0
        %2090 = vmatpush1.msra.mxu0 0.0
        %2091 = vmatprep.subr.mxu0 0.0
        %2092 = vmatpush1.msra.mxu0 0.0
        %2093 = vmatprep.subr.mxu0 0.0
        %2094 = vmatpush1.msra.mxu0 0.0
        %2095 = vmatprep.subr.mxu0 0.0
        %2096 = vmatpush1.msra.mxu0 0.0
        %2097 = vmatprep.subr.mxu0 0.0
        %2098 = vmatpush1.msra.mxu0 0.0
        %2099 = vmatprep.subr.mxu0 0.0
        %2100 = vmatpush1.msra.mxu0 0.0
        %2101 = vmatprep.subr.mxu0 0.0
        %2102 = vmatpush1.msra.mxu0 0.0
        %2103 = vmatprep.subr.mxu0 0.0
        %2104 = vmatpush1.msra.mxu0 0.0
        %2105 = vmatprep.subr.mxu0 0.0
        %2106 = vmatpush1.msra.mxu0 0.0
        %2107 = vmatprep.subr.mxu0 0.0
        %2108 = vmatpush1.msra.mxu0 %v1863
        %2109 = vmatprep.subr.mxu0 0.0
        %2110 = vmatpush1.msra.mxu0 %v1862
        %2111 = vmatprep.subr.mxu0 0.0
        %2112 = vmatpush1.msra.mxu0 %v1861
        %2113 = vmatprep.subr.mxu0 0.0
        %2114 = vmatpush1.msra.mxu0 %v1860
        %2115 = vmatprep.subr.mxu0 0.0
        %2116 = vmatpush2.msra.mxu0 0.0
        %2117 = vmatprep.subr.mxu0 0.0
        %2118 = vmatpush2.msra.mxu0 0.0
        %2119 = vmatprep.subr.mxu0 0.0
        %2120 = vmatpush2.msra.mxu0 0.0
        %2121 = vmatprep.subr.mxu0 0.0
        %2122 = vmatpush2.msra.mxu0 0.0
        %2123 = vmatprep.subr.mxu0 0.0
        %2124 = vmatpush2.msra.mxu0 0.0
        %2125 = vmatprep.subr.mxu0 0.0
        %2126 = vmatpush2.msra.mxu0 0.0
        %2127 = vmatprep.subr.mxu0 0.0
        %2128 = vmatpush2.msra.mxu0 0.0
        %2129 = vmatprep.subr.mxu0 0.0
        %2130 = vmatpush2.msra.mxu0 0.0
        %2131 = vmatprep.subr.mxu0 0.0
        %2132 = vmatpush2.msra.mxu0 0.0
        %2133 = vmatprep.subr.mxu0 0.0
        %2134 = vmatpush2.msra.mxu0 0.0
        %2135 = vmatprep.subr.mxu0 0.0
        %2136 = vmatpush2.msra.mxu0 0.0
        %2137 = vmatprep.subr.mxu0 0.0
        %2138 = vmatpush2.msra.mxu0 0.0
        %2139 = vmatprep.subr.mxu0 0.0
        %2140 = vmatpush2.msra.mxu0 0.0
        %2141 = vmatprep.subr.mxu0 0.0
        %2142 = vmatpush2.msra.mxu0 0.0
        %2143 = vmatprep.subr.mxu0 0.0
        %2144 = vmatpush2.msra.mxu0 0.0
        %2145 = vmatprep.subr.mxu0 0.0
        %2146 = vmatpush2.msra.mxu0 0.0
        %2147 = vmatprep.mubr.f32.mxu0 0.0
        %2148 = vmatmul.mubr.f32.gmra.mxu0 %v2072
        %v2149 = vpop.f32.mrf.mxu0
        %v2150 = vadd.f32 0.0, %v2149
        %v2151 = vpop.f32.mrf.mxu0
        %2152 = vmatprep.mubr.f32.mxu0 0.0
        %2153 = vmatmul.mubr.f32.gmra.mxu0 %v2075
        %v2154 = vpop.f32.mrf.mxu0
        %v2155 = vadd.f32 0.0, %v2154
        %v2156 = vpop.f32.mrf.mxu0
        %2157 = vmatprep.mubr.f32.mxu0 0.0
        %2158 = vmatmul.mubr.f32.gmra.mxu0 %v2078
        %v2159 = vpop.f32.mrf.mxu0
        %v2160 = vadd.f32 0.0, %v2159
        %v2161 = vpop.f32.mrf.mxu0
        %2162 = vmatprep.mubr.f32.mxu0 0.0
        %2163 = vmatmul.mubr.f32.gmra.mxu0 %v2081
        %v2164 = vpop.f32.mrf.mxu0
        %v2165 = vadd.f32 0.0, %v2164
        %v2166 = vpop.f32.mrf.mxu0
        %2167 = vdwg.mxu0
        %v2169 = vsel %vm1961, %v2150, 0
        %v2172 = vsel %vm1961, %v2155, 0
        %v2175 = vsel %vm1961, %v2160, 0
        %v2178 = vsel %vm1961, %v2165, 0
        %2180 = vmatprep.subr.mxu0 0.0
        %2181 = vmatpush1.msra.mxu0 0.0
        %2182 = vmatprep.subr.mxu0 0.0
        %2183 = vmatpush1.msra.mxu0 0.0
        %2184 = vmatprep.subr.mxu0 0.0
        %2185 = vmatpush1.msra.mxu0 0.0
        %2186 = vmatprep.subr.mxu0 0.0
        %2187 = vmatpush1.msra.mxu0 0.0
        %2188 = vmatprep.subr.mxu0 0.0
        %2189 = vmatpush1.msra.mxu0 0.0
        %2190 = vmatprep.subr.mxu0 0.0
        %2191 = vmatpush1.msra.mxu0 0.0
        %2192 = vmatprep.subr.mxu0 0.0
        %2193 = vmatpush1.msra.mxu0 0.0
        %2194 = vmatprep.subr.mxu0 0.0
        %2195 = vmatpush1.msra.mxu0 0.0
        %2196 = vmatprep.subr.mxu0 0.0
        %2197 = vmatpush1.msra.mxu0 0.0
        %2198 = vmatprep.subr.mxu0 0.0
        %2199 = vmatpush1.msra.mxu0 0.0
        %2200 = vmatprep.subr.mxu0 0.0
        %2201 = vmatpush1.msra.mxu0 0.0
        %2202 = vmatprep.subr.mxu0 0.0
        %2203 = vmatpush1.msra.mxu0 0.0
        %2204 = vmatprep.subr.mxu0 0.0
        %2205 = vmatpush1.msra.mxu0 0.0
        %2206 = vmatprep.subr.mxu0 0.0
        %2207 = vmatpush1.msra.mxu0 0.0
        %2208 = vmatprep.subr.mxu0 0.0
        %2209 = vmatpush1.msra.mxu0 0.0
        %2210 = vmatprep.subr.mxu0 0.0
        %2211 = vmatpush1.msra.mxu0 %v1976
        %2212 = vmatprep.subr.mxu0 0.0
        %2213 = vmatpush2.msra.mxu0 0.0
        %2214 = vmatprep.subr.mxu0 0.0
        %2215 = vmatpush2.msra.mxu0 0.0
        %2216 = vmatprep.subr.mxu0 0.0
        %2217 = vmatpush2.msra.mxu0 0.0
        %2218 = vmatprep.subr.mxu0 0.0
        %2219 = vmatpush2.msra.mxu0 0.0
        %2220 = vmatprep.subr.mxu0 0.0
        %2221 = vmatpush2.msra.mxu0 0.0
        %2222 = vmatprep.subr.mxu0 0.0
        %2223 = vmatpush2.msra.mxu0 0.0
        %2224 = vmatprep.subr.mxu0 0.0
        %2225 = vmatpush2.msra.mxu0 0.0
        %2226 = vmatprep.subr.mxu0 0.0
        %2227 = vmatpush2.msra.mxu0 0.0
        %2228 = vmatprep.subr.mxu0 0.0
        %2229 = vmatpush2.msra.mxu0 0.0
        %2230 = vmatprep.subr.mxu0 0.0
        %2231 = vmatpush2.msra.mxu0 0.0
        %2232 = vmatprep.subr.mxu0 0.0
        %2233 = vmatpush2.msra.mxu0 0.0
        %2234 = vmatprep.subr.mxu0 0.0
        %2235 = vmatpush2.msra.mxu0 0.0
        %2236 = vmatprep.subr.mxu0 0.0
        %2237 = vmatpush2.msra.mxu0 0.0
        %2238 = vmatprep.subr.mxu0 0.0
        %2239 = vmatpush2.msra.mxu0 0.0
        %2240 = vmatprep.subr.mxu0 0.0
        %2241 = vmatpush2.msra.mxu0 0.0
        %2242 = vmatprep.subr.mxu0 0.0
        %2243 = vmatpush2.msra.mxu0 0.0
        %2244 = vmatprep.mubr.f32.mxu0 0.0
        %2245 = vmatmul.mubr.f32.gmra.mxu0 %v2169
        %v2246 = vpop.f32.mrf.mxu0
        %v2247 = vadd.f32 1e-05, %v2246
        %v2248 = vpop.f32.mrf.mxu0
        %2249 = vmatprep.mubr.f32.mxu0 0.0
        %2250 = vmatmul.mubr.f32.gmra.mxu0 %v2172
        %v2251 = vpop.f32.mrf.mxu0
        %v2252 = vadd.f32 1e-05, %v2251
        %v2253 = vpop.f32.mrf.mxu0
        %2254 = vmatprep.mubr.f32.mxu0 0.0
        %2255 = vmatmul.mubr.f32.gmra.mxu0 %v2175
        %v2256 = vpop.f32.mrf.mxu0
        %v2257 = vadd.f32 1e-05, %v2256
        %v2258 = vpop.f32.mrf.mxu0
        %2259 = vmatprep.mubr.f32.mxu0 0.0
        %2260 = vmatmul.mubr.f32.gmra.mxu0 %v2178
        %v2261 = vpop.f32.mrf.mxu0
        %v2262 = vadd.f32 1e-05, %v2261
        %v2263 = vpop.f32.mrf.mxu0
        %2264 = vdwg.mxu0
        %v2265 = vrsqrt.pop %v2247
        %v2266 = vrsqrt.pop %v2252
        %v2267 = vrsqrt.pop %v2257
        %v2268 = vrsqrt.pop %v2262
        %v2269 = vmul.f32 %v2063, %v2265
        %v2270 = vmul.f32 %v2064, %v2266
        %v2271 = vmul.f32 %v2065, %v2267
        %v2272 = vmul.f32 %v2066, %v2268
        %v2273 = vld [vmem:[%s15] sm:$0x1]
        %v2275 = vlaneseq
        %v2276 = vshrl.u32 %v2275, 7
        %v2277 = vsub.s32 0, %v2276
        %v2278 = vrot.slane %v2273, %v2277
        %v2280 = vmul.f32 %v2269, %v2278
        %v2281 = vmul.f32 %v2270, %v2278
        %v2282 = vmul.f32 %v2271, %v2278
        %v2283 = vmul.f32 %v2272, %v2278
        %v2284 = vld [vmem:[%s16] sm:$0x1]
        %v2286 = vlaneseq
        %v2287 = vshrl.u32 %v2286, 7
        %v2288 = vsub.s32 0, %v2287
        %v2289 = vrot.slane %v2284, %v2288
        %v2291 = vadd.f32 %v2280, %v2289
        %v2292 = vadd.f32 %v2281, %v2289
        %v2293 = vadd.f32 %v2282, %v2289
        %v2294 = vadd.f32 %v2283, %v2289
        %v2295 = vxor.u32 %v974, 2147483648
        %v2296 = vxor.u32 %v977, 2147483648
        %v2297 = vxor.u32 %v982, 2147483648
        %v2298 = vxor.u32 %v985, 2147483648
        %v2299 = vmul.f32 %v2295, 1.442695
        %v2300 = vpow.pop %v2299
        %v2301 = vmul.f32 %v2296, 1.442695
        %v2302 = vpow.pop %v2301
        %v2303 = vmul.f32 %v2297, 1.442695
        %v2304 = vpow.pop %v2303
        %v2305 = vmul.f32 %v2298, 1.442695
        %v2306 = vpow.pop %v2305
        %v2307 = vadd.f32 %v2300, 1.0
        %v2308 = vadd.f32 %v2302, 1.0
        %v2309 = vadd.f32 %v2304, 1.0
        %v2310 = vadd.f32 %v2306, 1.0
        %v2311 = vrcp.pop %v2307
        %v2312 = vmul.f32 1.0, %v2311
        %v2313 = vrcp.pop %v2308
        %v2314 = vmul.f32 1.0, %v2313
        %v2315 = vrcp.pop %v2309
        %v2316 = vmul.f32 1.0, %v2315
        %v2317 = vrcp.pop %v2310
        %v2318 = vmul.f32 1.0, %v2317
        %v2319 = vmul.f32 %v974, %v2312
        %v2320 = vmul.f32 %v977, %v2314
        %v2321 = vmul.f32 %v982, %v2316
        %v2322 = vmul.f32 %v985, %v2318
        %v2323 = vmul.f32 %v2319, %v2291
        %v2324 = vmul.f32 %v2320, %v2292
        %v2325 = vmul.f32 %v2321, %v2293
        %v2326 = vmul.f32 %v2322, %v2294
        %v2327 = vpack.c.bf16 %v2324, %v2323
        %v2328 = vpack.c.bf16 %v2326, %v2325
        %v2329 = vld [vmem:[#allocation11] sm:$0xf]
        %v2330 = vld [vmem:[#allocation11 + $0x4] sm:$0xf]
        %v2331 = vld [vmem:[#allocation11 + $0x8] sm:$0xf]
        %v2332 = vld [vmem:[#allocation11 + $0xc] sm:$0xf]
        %v2337 = vunpack.c.l.b16 %v2329
        %v2338 = vunpack.c.l.b16 %v2330
        %v2339 = vunpack.c.l.b16 %v2331
        %v2340 = vunpack.c.l.b16 %v2332
        %v2341 = vpack.c.b16 %v2338, %v2337
        %v2342 = vpack.c.b16 %v2340, %v2339
        %v2346 = vsel %vm737, %v2327, 0
        %v2349 = vsel %vm737, %v2328, 0
        %2351 = vmatprep.subr.bf16.mxu0 0
        %2352 = vmatpush1.bf16.msra.mxu0 0
        %2353 = vmatprep.subr.bf16.mxu0 0
        %2354 = vmatpush1.bf16.msra.mxu0 0
        %2355 = vmatprep.subr.bf16.mxu0 0
        %2356 = vmatpush1.bf16.msra.mxu0 0
        %2357 = vmatprep.subr.bf16.mxu0 0
        %2358 = vmatpush1.bf16.msra.mxu0 0
        %2359 = vmatprep.subr.bf16.mxu0 0
        %2360 = vmatpush1.bf16.msra.mxu0 0
        %2361 = vmatprep.subr.bf16.mxu0 0
        %2362 = vmatpush1.bf16.msra.mxu0 0
        %2363 = vmatprep.subr.bf16.mxu0 0
        %2364 = vmatpush1.bf16.msra.mxu0 %v2342
        %2365 = vmatprep.subr.bf16.mxu0 0
        %2366 = vmatpush1.bf16.msra.mxu0 %v2341
        %2367 = vmatprep.subr.bf16.mxu0 0
        %2368 = vmatpush2.bf16.msra.mxu0 0
        %2369 = vmatprep.subr.bf16.mxu0 0
        %2370 = vmatpush2.bf16.msra.mxu0 0
        %2371 = vmatprep.subr.bf16.mxu0 0
        %2372 = vmatpush2.bf16.msra.mxu0 0
        %2373 = vmatprep.subr.bf16.mxu0 0
        %2374 = vmatpush2.bf16.msra.mxu0 0
        %2375 = vmatprep.subr.bf16.mxu0 0
        %2376 = vmatpush2.bf16.msra.mxu0 0
        %2377 = vmatprep.subr.bf16.mxu0 0
        %2378 = vmatpush2.bf16.msra.mxu0 0
        %2379 = vmatprep.subr.bf16.mxu0 0
        %2380 = vmatpush2.bf16.msra.mxu0 0
        %2381 = vmatprep.subr.bf16.mxu0 0
        %2382 = vmatpush2.bf16.msra.mxu0 0
        %2383 = vmatprep.mubr.bf16.mxu0 0
        %2384 = vmatmul.mubr.bf16.gmra.mxu0 %v2346
        %v2385 = vpop.f32.mrf.mxu0
        %v2386 = vadd.f32 0.0, %v2385
        %v2387 = vpop.f32.mrf.mxu0
        %v2388 = vpop.f32.mrf.mxu0
        %v2389 = vadd.f32 0.0, %v2388
        %v2390 = vpop.f32.mrf.mxu0
        %2391 = vmatprep.mubr.bf16.mxu0 0
        %2392 = vmatmul.mubr.bf16.gmra.mxu0 %v2349
        %v2393 = vpop.f32.mrf.mxu0
        %v2394 = vadd.f32 0.0, %v2393
        %v2395 = vpop.f32.mrf.mxu0
        %v2396 = vpop.f32.mrf.mxu0
        %v2397 = vadd.f32 0.0, %v2396
        %v2398 = vpop.f32.mrf.mxu0
        %2399 = vdwg.mxu0
        %2400 = vst.msk [vmem:[%s711] sm:$0xff] %vm737, %v2386
        %2401 = vst.msk [vmem:[%s711 + $0x8] sm:$0xff] %vm737, %v2389
        %2402 = vst.msk [vmem:[%s711 + $0x10] sm:$0xff] %vm737, %v2394
        %2403 = vst.msk [vmem:[%s711 + $0x18] sm:$0xff] %vm737, %v2397
        %s2404 = sand.u32 %s409, 1
        %s2405 = scalar_lea.sflag [#allocation4], %s2404
        %s2406 = sand.u32 %s409, 1
        %s2407 = smul.addr %s2406, 32
        %s2408 = scalar_lea.vmem [#allocation20], %s2407
        // Predicated region
        $region133: #{tpu_custom_call.1} parent=87 // pred_check
          %p2409 = pneg %p419
        $region134: #{tpu_custom_call.1} parent=87 // pred_check_branch
          %2411 = sbr.rel (%p2409) target = $region136
        $region135: #{tpu_custom_call.1} parent=87 // pred_region
          %s2412 = smul.u32 4, %s39
          %s2414 = ssub.s32 512, 512
          %2415 = vsyncadd %s2405, %s2414
          %s2416 = smul.addr %s2412, 128
          %s2417 = scalar_lea.hbm %s17, %s2416
          %s2418 = sshll.u32 %s2408, 4
          %s2419 = int_to_ptr.vmem [resolvable:$true] %s2418
          %2424 = dma.vmem_to_hbm [thread:$0]  %s2419, 512, %s2417, %s2405, 128, 128, 8
        $region136: #{tpu_custom_call.1} parent=87 // pred_fallthru
          _
      $region88: #{tpu_custom_call.1} parent=5 // pred_fallthru
        _
      %p2425 = scmp.le.s32.totalorder 2, %s34
      // Predicated region
      $region137: #{tpu_custom_call.1} parent=5 // pred_check
        %p2426 = pneg %p2425
      $region138: #{tpu_custom_call.1} parent=5 // pred_check_branch
        %2428 = sbr.rel (%p2426) target = $region140
      $region139: #{tpu_custom_call.1} parent=5 // pred_region
        %s2429 = ssub.s32 %s34, 2
        // Predicated region
        $region141: #{tpu_custom_call.1} parent=139 // pred_check
          %p2430 = pneg %p425
        $region142: #{tpu_custom_call.1} parent=139 // pred_check_branch
          %2432 = sbr.rel (%p2430) target = $region144
        $region143: #{tpu_custom_call.1} parent=139 // pred_region
          %s2433 = sand.u32 %s410, 1
          %s2434 = scalar_lea.sflag [#allocation4], %s2433
          %s2435 = sand.u32 %s410, 1
          %s2436 = smul.addr %s2435, 32
          %s2437 = scalar_lea.vmem [#allocation20], %s2436
          %2438 = dma.done %s2434, 512
        $region144: #{tpu_custom_call.1} parent=139 // pred_fallthru
          _
      $region140: #{tpu_custom_call.1} parent=5 // pred_fallthru
        _
    $region6: #{tpu_custom_call.1} parent=1 // loop_footer
      %s38 = sadd.s32 1, %s34
    $region7: #{tpu_custom_call.1} parent=1 // loop_footer_branch
      %33 = sbr.rel target = $region3
    $region8: #{tpu_custom_call.1} parent=1 // loop_exit
      _
    %2439 = vsyncpa [#allocation3], 1
    %s2440 = scalar_lea.sflag [#allocation3], 1
    %2441 = vsyncpa %s2440, 1
    %2442 = vsyncpa [#allocation6], 1
    %2443 = vsyncpa [#allocation9], 1
    %2444 = vsyncpa [#allocation12], 1
    %2445 = vsyncpa [#allocation15], 1
    %2446 = vsyncpa [#allocation18], 1
    %2447 = vsyncpa [#allocation4], 1
    %s2448 = scalar_lea.sflag [#allocation4], 1
    %2449 = vsyncpa %s2448, 1

</llo_original>
